<compile_context>
chip_gen: v6e
topology: v6e:2x2x1
jax: 0.10.0
libtpu: 0.0.40
codegen_flags: <defaults>
</compile_context>

<pallas_src>
import functools

import jax
import jax.numpy as jnp
import numpy as np
from jax.experimental import pallas as pl
from jax.experimental.pallas import tpu as pltpu


# ----------------------------------------------------------------------------
# Fused decoder kernel: one grid step == one full decoder forward step
# ----------------------------------------------------------------------------
def _make_decoder_kernel(n_merge, alpha, fea_num):
    F = fea_num
    a = float(alpha)

    def kernel(idx_ref,                       # SMEM (T, 3) int32 (scalar prefetch)
               emb_tbl_ref,                   # (LB, F)  frozen embedding table
               wm_ref, bm_ref,                # merge linear (n_merge*F, F) / (1, F)
               weh_ref, beh_ref,              # emb_hidden   (2F, F) / (1, F)
               wa_ref, ba_ref,                # atten_w      (F, K+1) / (1, K+1)
               enc_ref,                       # encoder_outputs[0]   (K+1, 2F)
               wl_ref, bl_ref,                # self.linear  (2F, F) / (1, F)
               wih_ref, whh_ref, bg_ref,      # LSTM         (F, 4F)/(F, 4F)/(1, 4F)
               h0_ref, c0_ref,                # initial state (1, F)
               wo_ref, bo_ref,                # self.out     (F, out_num)/(1, out_num)
               out_ref,                       # packed per-step output (1, 2F+out_num)
               h_sc, c_sc):                   # VMEM scratch: recurrent state
        t = pl.program_id(0)
        dot = lambda x, y: jnp.dot(x, y, preferred_element_type=jnp.float32)

        @pl.when(t == 0)
        def _():
            h_sc[...] = h0_ref[...]
            c_sc[...] = c0_ref[...]

        h0 = h_sc[...]
        c0 = c_sc[...]

        # Embedding gathers via one-hot @ table: stays on the MXU, no dynamic
        # VMEM slicing, indices come from SMEM (scalar prefetch).
        LB = emb_tbl_ref.shape[0]
        lane = jax.lax.broadcasted_iota(jnp.int32, (1, LB), 1)

        def row(i):
            return dot((lane == i).astype(jnp.float32), emb_tbl_ref[...])   # (1, F)

        emb1 = row(idx_ref[t, 0])
        if n_merge == 2:
            # alpha == 0: E[i+3] * (1 - 0);  alpha == 1: E[i+2] * 1  -> no scale.
            emb2 = row(idx_ref[t, 1])
            emb = (dot(emb1, wm_ref[0:F, :]) +
                   dot(emb2, wm_ref[F:2 * F, :]) + bm_ref[...])              # (1, F)
        else:
            emb2 = row(idx_ref[t, 1]) * a
            emb3 = row(idx_ref[t, 2]) * (1.0 - a)
            emb = (dot(emb1, wm_ref[0:F, :]) +
                   dot(emb2, wm_ref[F:2 * F, :]) +
                   dot(emb3, wm_ref[2 * F:3 * F, :]) + bm_ref[...])          # (1, F)

        # emb_hidden(cat(emb, h0)) -- concat expressed as split matmuls
        inp0 = dot(emb, weh_ref[0:F, :]) + dot(h0, weh_ref[F:2 * F, :]) + beh_ref[...]

        # attention weights, bmm with encoder outputs, self.linear
        aw = dot(inp0, wa_ref[...]) + ba_ref[...]                            # (1, K+1)
        awo = dot(aw, enc_ref[...])                                          # (1, 2F)
        applied = dot(awo, wl_ref[...]) + bl_ref[...]                        # (1, F)

        # self.linear(cat(emb, applied)) + relu (same linear used twice)
        x = dot(emb, wl_ref[0:F, :]) + dot(applied, wl_ref[F:2 * F, :]) + bl_ref[...]
        x = jnp.maximum(x, 0.0)

        # single-layer unidirectional LSTM cell (PyTorch gate order i, f, g, o)
        gates = dot(x, wih_ref[...]) + dot(h0, whh_ref[...]) + bg_ref[...]   # (1, 4F)
        i_g = jax.nn.sigmoid(gates[:, 0:F])
        f_g = jax.nn.sigmoid(gates[:, F:2 * F])
        g_g = jnp.tanh(gates[:, 2 * F:3 * F])
        o_g = jax.nn.sigmoid(gates[:, 3 * F:4 * F])
        c_t = f_g * c0 + i_g * g_g
        h_t = o_g * jnp.tanh(c_t)

        # output projection + LogSoftmax(dim=2)
        logits = dot(h_t, wo_ref[...]) + bo_ref[...]                         # (1, out_num)
        m = jnp.max(logits, axis=1, keepdims=True)
        logp = logits - (m + jnp.log(jnp.sum(jnp.exp(logits - m), axis=1, keepdims=True)))

        # one packed, lane-contiguous store per step: [h_t | c_t | logp]
        out_ref[...] = jnp.concatenate([h_t, c_t, logp], axis=1)

        # carry recurrent state to the next grid step
        h_sc[...] = h_t
        c_sc[...] = c_t

    return kernel


# ----------------------------------------------------------------------------
# Fused multi-step decode (one pallas_call for T steps)
# ----------------------------------------------------------------------------
@functools.partial(jax.jit, static_argnums=(2,))
def _fused_decode(params, idx_tbl, alpha, h0, c0, enc0):
    F = params["lab_emb"].shape[1]
    out_num = params["W_out_t"].shape[1]
    T = idx_tbl.shape[0]

    n_merge = 2 if (alpha == 0 or alpha == 1) else 3
    wm = params["W2m_t"] if n_merge == 2 else params["W3m_t"]
    bm = params["b2m_b"] if n_merge == 2 else params["b3m_b"]

    PACK = 2 * F + out_num
    kernel = _make_decoder_kernel(n_merge, float(alpha), F)

    ops = (params["lab_emb"], wm, bm,
           params["W_eh_t"], params["b_eh_b"],
           params["W_a_t"], params["b_a_b"],
           enc0,
           params["W_l_t"], params["b_l_b"],
           params["W_ih_t"], params["W_hh_t"], params["b_g_b"],
           h0, c0,
           params["W_out_t"], params["b_out_b"])

    # Full-array blocks with constant index maps -> DMA'd once, VMEM-resident.
    def resident(arr):
        n = arr.ndim
        return pl.BlockSpec(arr.shape, lambda t, idx, _n=n: (0,) * _n)

    in_specs = [resident(a) for a in ops]
    out_spec = pl.BlockSpec((None, 1, PACK), lambda t, idx: (t, 0, 0))

    packed = pl.pallas_call(
        kernel,
        out_shape=jax.ShapeDtypeStruct((T, 1, PACK), jnp.float32),
        grid_spec=pltpu.PrefetchScalarGridSpec(
            num_scalar_prefetch=1,
            grid=(T,),
            in_specs=in_specs,
            out_specs=out_spec,
            scratch_shapes=[pltpu.VMEM((1, F), jnp.float32),
                            pltpu.VMEM((1, F), jnp.float32)]),
        compiler_params=pltpu.CompilerParams(
            dimension_semantics=("arbitrary",)),
    )(idx_tbl, *ops)

    packed = packed.reshape(T, PACK)
    h_all = packed[:, :F]
    c_all = packed[:, F:2 * F]
    logp = packed[:, 2 * F:]
    return logp, h_all, c_all


def label_decoder_decode_fused(params, indices, lab_value, alpha, state, encoder_outputs):
    """Runs the Label_Decoder forward for each index in `indices` (sequentially,
    state carried step to step) inside a single fused pallas_call.
    Returns (log_probs (T, out_num), (h_all (T, F), c_all (T, F)))."""
    F = params["lab_emb"].shape[1]
    indices = jnp.atleast_1d(jnp.asarray(indices, jnp.int32))
    lab_value = jnp.asarray(lab_value)

    # emb1 row select: index if lab_value[index] else index + 1 (no host sync).
    idx1 = jnp.where(lab_value[indices] != 0, indices, indices + 1)
    if alpha == 0:
        second, third = indices + 3, indices + 3      # third unused (2-way merge)
    elif alpha == 1:
        second, third = indices + 2, indices + 2      # third unused (2-way merge)
    else:
        second, third = indices + 2, indices + 3
    idx_tbl = jnp.stack([idx1, second, third], axis=1).astype(jnp.int32)

    h0, c0 = state
    h0 = h0.reshape(1, F)
    c0 = c0.reshape(1, F)
    enc0 = encoder_outputs[0]

    logp, h_all, c_all = _fused_decode(params, idx_tbl, float(alpha), h0, c0, enc0)
    return logp, (h_all, c_all)


def label_decoder_forward(params, index, lab_value, alpha, state, encoder_outputs):
    """Module-equivalent single-step API.
    Returns (log_probs (1, 1, out_num), (h_t (1, 1, F), c_t (1, 1, F)))."""
    F = params["lab_emb"].shape[1]
    logp, (h_all, c_all) = label_decoder_decode_fused(
        params, jnp.asarray([index], jnp.int32), lab_value, alpha, state, encoder_outputs)
    out_num = logp.shape[-1]
    return logp.reshape(1, 1, out_num), (h_all.reshape(1, 1, F), c_all.reshape(1, 1, F))


# ----------------------------------------------------------------------------
# Pure-JAX stepwise reference (mirrors the PyTorch forward)
# ----------------------------------------------------------------------------
def _ref_step(params, index, lab_value, alpha, state, enc0):
    F = params["lab_emb"].shape[1]
    E = params["lab_emb"]
    idx = jnp.where(lab_value[index] != 0, index, index + 1)
    emb1 = E[idx][None, :]
    if alpha == 0:
        emb2 = E[index + 3][None, :] * (1.0 - alpha)
        emb = jnp.concatenate([emb1, emb2], axis=1) @ params["W2m_t"] + params["b2m_b"]
    elif alpha == 1:
        emb2 = E[index + 2][None, :] * alpha
        emb = jnp.concatenate([emb1, emb2], axis=1) @ params["W2m_t"] + params["b2m_b"]
    else:
        emb2 = E[index + 2][None, :] * alpha
        emb3 = E[index + 3][None, :] * (1.0 - alpha)
        emb = jnp.concatenate([emb1, emb2, emb3], axis=1) @ params["W3m_t"] + params["b3m_b"]
    h0, c0 = state
    h0 = h0.reshape(1, F)
    c0 = c0.reshape(1, F)
    inp0 = jnp.concatenate([emb, h0], axis=1) @ params["W_eh_t"] + params["b_eh_b"]
    aw = inp0 @ params["W_a_t"] + params["b_a_b"]
    awo = aw @ enc0
    applied = awo @ params["W_l_t"] + params["b_l_b"]
    x = jnp.maximum(
        jnp.concatenate([emb, applied], axis=1) @ params["W_l_t"] + params["b_l_b"], 0.0)
    gates = x @ params["W_ih_t"] + h0 @ params["W_hh_t"] + params["b_g_b"]
    i = jax.nn.sigmoid(gates[:, :F]); f = jax.nn.sigmoid(gates[:, F:2 * F])
    g = jnp.tanh(gates[:, 2 * F:3 * F]); o = jax.nn.sigmoid(gates[:, 3 * F:])
    c_t = f * c0 + i * g
    h_t = o * jnp.tanh(c_t)
    logits = h_t @ params["W_out_t"] + params["b_out_b"]
    return jax.nn.log_softmax(logits, axis=1), (h_t, c_t)


# ----------------------------------------------------------------------------
# Deterministic parameter construction (shapes from Label_Decoder.__init__).
# All kernel-side layouts (transposes, bias broadcasts, combined LSTM bias)
# are precomputed HERE, once, never per step.
# ----------------------------------------------------------------------------
def init_params(key, fea_num, lab_bos_num, k):
    ks = jax.random.split(key, 18)
    s = 0.1
    w = lambda kk, shape: jax.random.normal(kk, shape, jnp.float32) * s
    F = fea_num
    W2m = w(ks[1], (F, 2 * F)); b2m = w(ks[2], (F,))        # lab_2_merge
    W3m = w(ks[3], (F, 3 * F)); b3m = w(ks[4], (F,))        # lab_3_merge
    W_eh = w(ks[5], (F, 2 * F)); b_eh = w(ks[6], (F,))      # emb_hidden
    W_a = w(ks[7], (k + 1, F)); b_a = w(ks[8], (k + 1,))    # atten_w
    W_l = w(ks[9], (F, 2 * F)); b_l = w(ks[10], (F,))       # linear
    W_ih = w(ks[11], (4 * F, F)); W_hh = w(ks[12], (4 * F, F))
    b_ih = w(ks[13], (4 * F,)); b_hh = w(ks[14], (4 * F,))
    W_out = w(ks[15], (lab_bos_num, F)); b_out = w(ks[16], (lab_bos_num,))  # out
    return dict(
        lab_emb=w(ks[0], (lab_bos_num, F)),                 # frozen embedding
        W2m_t=W2m.T, b2m_b=b2m[None, :],
        W3m_t=W3m.T, b3m_b=b3m[None, :],
        W_eh_t=W_eh.T, b_eh_b=b_eh[None, :],
        W_a_t=W_a.T, b_a_b=b_a[None, :],
        W_l_t=W_l.T, b_l_b=b_l[None, :],
        W_ih_t=W_ih.T, W_hh_t=W_hh.T, b_g_b=(b_ih + b_hh)[None, :],
        W_out_t=W_out.T, b_out_b=b_out[None, :],
        # TODO(synk): self.all_lab_emb, self.dropout and the GRU branch are not
        # exercised by this forward configuration and are not materialized.
    )


if __name__ == "__main__":
    F = 32           # fea_num / hidden_size
    LAB_BOS = 10     # lab_bos_num (lab_num = 8)
    K = 7            # attention size -> k + 1 = 8
    T = 4            # decode steps fused into ONE pallas_call

    key = jax.random.PRNGKey(0)
    kp, kh, kc, ke = jax.random.split(key, 4)
    params = init_params(kp, F, LAB_BOS, K)

    lab_value = jnp.array([1, 0, 1, 1, 0, 1, 0, 1, 1, 0], dtype=jnp.int32)
    alpha = 0.3
    indices = jnp.arange(T, dtype=jnp.int32)     # index + 3 stays < LAB_BOS
    h0 = jax.random.normal(kh, (1, 1, F), jnp.float32) * 0.1
    c0 = jax.random.normal(kc, (1, 1, F), jnp.float32) * 0.1
    encoder_outputs = jax.random.normal(ke, (1, K + 1, 2 * F), jnp.float32) * 0.1

    # fused multi-step decode: one launch, resident weights, state in scratch
    logp_all, (h_all, c_all) = label_decoder_decode_fused(
        params, indices, lab_value, alpha, (h0, c0), encoder_outputs)
    jax.block_until_ready((logp_all, h_all, c_all))

    # correctness check against a stepwise pure-JAX reference
    state = (h0.reshape(1, F), c0.reshape(1, F))
    enc0 = encoder_outputs[0]
    for t in range(T):
        ref_logp, state = _ref_step(params, t, lab_value, alpha, state, enc0)
        np.testing.assert_allclose(np.asarray(logp_all[t]), np.asarray(ref_logp)[0],
                                   atol=1e-4, rtol=1e-4)
        np.testing.assert_allclose(np.asarray(h_all[t]), np.asarray(state[0])[0],
                                   atol=1e-4, rtol=1e-4)
        np.testing.assert_allclose(np.asarray(c_all[t]), np.asarray(state[1])[0],
                                   atol=1e-4, rtol=1e-4)

    # module-equivalent single-step API; alpha == 0 exercises the 2-way merge path
    out1, st1 = label_decoder_forward(params, 2, lab_value, 0.0, (h0, c0), encoder_outputs)
    jax.block_until_ready((out1, st1))
    ref1, refst1 = _ref_step(params, 2, lab_value, 0.0,
                             (h0.reshape(1, F), c0.reshape(1, F)), enc0)
    np.testing.assert_allclose(np.asarray(out1)[0, 0], np.asarray(ref1)[0],
                               atol=1e-4, rtol=1e-4)
    np.testing.assert_allclose(np.asarray(st1[0])[0, 0], np.asarray(refst1[0])[0],
                               atol=1e-4, rtol=1e-4)

    print("KERNEL_OK")
</pallas_src>

<mosaic_0001>
module attributes {stable_mosaic.version = 11 : i64} {
  func.func @kernel(%arg0: i32, %arg1: memref<4x3xi32, #tpu.memory_space<smem>>, %arg2: memref<10x32xf32, #tpu.memory_space<vmem>>, %arg3: memref<96x32xf32, #tpu.memory_space<vmem>>, %arg4: memref<1x32xf32, #tpu.memory_space<vmem>>, %arg5: memref<64x32xf32, #tpu.memory_space<vmem>>, %arg6: memref<1x32xf32, #tpu.memory_space<vmem>>, %arg7: memref<32x8xf32, #tpu.memory_space<vmem>>, %arg8: memref<1x8xf32, #tpu.memory_space<vmem>>, %arg9: memref<8x64xf32, #tpu.memory_space<vmem>>, %arg10: memref<64x32xf32, #tpu.memory_space<vmem>>, %arg11: memref<1x32xf32, #tpu.memory_space<vmem>>, %arg12: memref<32x128xf32, #tpu.memory_space<vmem>>, %arg13: memref<32x128xf32, #tpu.memory_space<vmem>>, %arg14: memref<1x128xf32, #tpu.memory_space<vmem>>, %arg15: memref<1x32xf32, #tpu.memory_space<vmem>>, %arg16: memref<1x32xf32, #tpu.memory_space<vmem>>, %arg17: memref<32x10xf32, #tpu.memory_space<vmem>>, %arg18: memref<1x10xf32, #tpu.memory_space<vmem>>, %arg19: memref<1x1x74xf32, #tpu.memory_space<vmem>>, %arg20: memref<1x32xf32, #tpu.memory_space<vmem>>, %arg21: memref<1x32xf32, #tpu.memory_space<vmem>>) attributes {dimension_semantics = [#tpu.dimension_semantics<arbitrary>], iteration_bounds = array<i64: 4>, scalar_prefetch = 1 : i64, scratch_operands = 2 : i64, tpu.core_type = #tpu.core_type<tc>, window_params = [{pipeline_mode = #tpu.pipeline_mode<synchronous>, transform_indices = @transform_0, window_bounds = array<i64: 10, 32>}, {pipeline_mode = #tpu.pipeline_mode<synchronous>, transform_indices = @transform_1, window_bounds = array<i64: 96, 32>}, {pipeline_mode = #tpu.pipeline_mode<synchronous>, transform_indices = @transform_2, window_bounds = array<i64: 1, 32>}, {pipeline_mode = #tpu.pipeline_mode<synchronous>, transform_indices = @transform_3, window_bounds = array<i64: 64, 32>}, {pipeline_mode = #tpu.pipeline_mode<synchronous>, transform_indices = @transform_4, window_bounds = array<i64: 1, 32>}, {pipeline_mode = #tpu.pipeline_mode<synchronous>, transform_indices = @transform_5, window_bounds = array<i64: 32, 8>}, {pipeline_mode = #tpu.pipeline_mode<synchronous>, transform_indices = @transform_6, window_bounds = array<i64: 1, 8>}, {pipeline_mode = #tpu.pipeline_mode<synchronous>, transform_indices = @transform_7, window_bounds = array<i64: 8, 64>}, {pipeline_mode = #tpu.pipeline_mode<synchronous>, transform_indices = @transform_8, window_bounds = array<i64: 64, 32>}, {pipeline_mode = #tpu.pipeline_mode<synchronous>, transform_indices = @transform_9, window_bounds = array<i64: 1, 32>}, {pipeline_mode = #tpu.pipeline_mode<synchronous>, transform_indices = @transform_10, window_bounds = array<i64: 32, 128>}, {pipeline_mode = #tpu.pipeline_mode<synchronous>, transform_indices = @transform_11, window_bounds = array<i64: 32, 128>}, {pipeline_mode = #tpu.pipeline_mode<synchronous>, transform_indices = @transform_12, window_bounds = array<i64: 1, 128>}, {pipeline_mode = #tpu.pipeline_mode<synchronous>, transform_indices = @transform_13, window_bounds = array<i64: 1, 32>}, {pipeline_mode = #tpu.pipeline_mode<synchronous>, transform_indices = @transform_14, window_bounds = array<i64: 1, 32>}, {pipeline_mode = #tpu.pipeline_mode<synchronous>, transform_indices = @transform_15, window_bounds = array<i64: 32, 10>}, {pipeline_mode = #tpu.pipeline_mode<synchronous>, transform_indices = @transform_16, window_bounds = array<i64: 1, 10>}, {transform_indices = @transform_17, window_bounds = array<i64: 1, 1, 74>}]} {
    %c0_i32 = arith.constant 0 : i32
    %0 = arith.cmpi eq, %arg0, %c0_i32 : i32
    %1 = arith.extui %0 : i1 to i32
    %c0_i32_0 = arith.constant 0 : i32
    %2 = arith.cmpi ne, %1, %c0_i32_0 : i32
    scf.if %2 {
      %c0_79 = arith.constant 0 : index
      %c0_80 = arith.constant 0 : index
      %123 = vector.load %arg15[%c0_79, %c0_80] : memref<1x32xf32, #tpu.memory_space<vmem>>, vector<1x32xf32>
      %c0_81 = arith.constant 0 : index
      %c0_82 = arith.constant 0 : index
      %124 = vector.load %arg20[%c0_81, %c0_82] : memref<1x32xf32, #tpu.memory_space<vmem>>, vector<1x32xf32>
      tpu.vector_store %arg20[%c0_81, %c0_82], %123 {strides = array<i32>} : memref<1x32xf32, #tpu.memory_space<vmem>>, vector<1x32xf32>,
      %c0_83 = arith.constant 0 : index
      %c0_84 = arith.constant 0 : index
      %125 = vector.load %arg16[%c0_83, %c0_84] : memref<1x32xf32, #tpu.memory_space<vmem>>, vector<1x32xf32>
      %c0_85 = arith.constant 0 : index
      %c0_86 = arith.constant 0 : index
      %126 = vector.load %arg21[%c0_85, %c0_86] : memref<1x32xf32, #tpu.memory_space<vmem>>, vector<1x32xf32>
      tpu.vector_store %arg21[%c0_85, %c0_86], %125 {strides = array<i32>} : memref<1x32xf32, #tpu.memory_space<vmem>>, vector<1x32xf32>,
    } else {
    }
    %c0 = arith.constant 0 : index
    %c0_1 = arith.constant 0 : index
    %3 = vector.load %arg20[%c0, %c0_1] : memref<1x32xf32, #tpu.memory_space<vmem>>, vector<1x32xf32>
    %c0_2 = arith.constant 0 : index
    %c0_3 = arith.constant 0 : index
    %4 = vector.load %arg21[%c0_2, %c0_3] : memref<1x32xf32, #tpu.memory_space<vmem>>, vector<1x32xf32>
    %5 = tpu.iota {dimensions = array<i32: 1>} : vector<1x10xi32>
    %6 = arith.index_cast %arg0 : i32 to index
    %c0_4 = arith.constant 0 : index
    %7 = memref.load %arg1[%6, %c0_4] : memref<4x3xi32, #tpu.memory_space<smem>>
    %8 = vector.broadcast %7 : i32 to vector<1x10xi32>
    %9 = arith.cmpi eq, %5, %8 : vector<1x10xi32>
    %10 = arith.extui %9 : vector<1x10xi1> to vector<1x10xi32>
    %11 = arith.sitofp %10 : vector<1x10xi32> to vector<1x10xf32>
    %c0_5 = arith.constant 0 : index
    %c0_6 = arith.constant 0 : index
    %12 = vector.load %arg2[%c0_5, %c0_6] : memref<10x32xf32, #tpu.memory_space<vmem>>, vector<10x32xf32>
    %cst = arith.constant dense<0.000000e+00> : vector<1x32xf32>
    %13 = tpu.matmul %11, %12, %cst {dimension_numbers = #tpu.dot_dimension_numbers<[1], [0], [0], [1], [0, 0, 1, 1], [], []>} : vector<1x10xf32>, vector<10x32xf32>, vector<1x32xf32> -> vector<1x32xf32>
    %14 = arith.index_cast %arg0 : i32 to index
    %c1 = arith.constant 1 : index
    %15 = memref.load %arg1[%14, %c1] : memref<4x3xi32, #tpu.memory_space<smem>>
    %16 = vector.broadcast %15 : i32 to vector<1x10xi32>
    %17 = arith.cmpi eq, %5, %16 : vector<1x10xi32>
    %18 = arith.extui %17 : vector<1x10xi1> to vector<1x10xi32>
    %19 = arith.sitofp %18 : vector<1x10xi32> to vector<1x10xf32>
    %c0_7 = arith.constant 0 : index
    %c0_8 = arith.constant 0 : index
    %20 = vector.load %arg2[%c0_7, %c0_8] : memref<10x32xf32, #tpu.memory_space<vmem>>, vector<10x32xf32>
    %cst_9 = arith.constant dense<0.000000e+00> : vector<1x32xf32>
    %21 = tpu.matmul %19, %20, %cst_9 {dimension_numbers = #tpu.dot_dimension_numbers<[1], [0], [0], [1], [0, 0, 1, 1], [], []>} : vector<1x10xf32>, vector<10x32xf32>, vector<1x32xf32> -> vector<1x32xf32>
    %cst_10 = arith.constant 3.000000e-01 : f32
    %22 = vector.broadcast %cst_10 : f32 to vector<1x32xf32>
    %23 = arith.mulf %21, %22 : vector<1x32xf32>
    %24 = arith.index_cast %arg0 : i32 to index
    %c2 = arith.constant 2 : index
    %25 = memref.load %arg1[%24, %c2] : memref<4x3xi32, #tpu.memory_space<smem>>
    %26 = vector.broadcast %25 : i32 to vector<1x10xi32>
    %27 = arith.cmpi eq, %5, %26 : vector<1x10xi32>
    %28 = arith.extui %27 : vector<1x10xi1> to vector<1x10xi32>
    %29 = arith.sitofp %28 : vector<1x10xi32> to vector<1x10xf32>
    %c0_11 = arith.constant 0 : index
    %c0_12 = arith.constant 0 : index
    %30 = vector.load %arg2[%c0_11, %c0_12] : memref<10x32xf32, #tpu.memory_space<vmem>>, vector<10x32xf32>
    %cst_13 = arith.constant dense<0.000000e+00> : vector<1x32xf32>
    %31 = tpu.matmul %29, %30, %cst_13 {dimension_numbers = #tpu.dot_dimension_numbers<[1], [0], [0], [1], [0, 0, 1, 1], [], []>} : vector<1x10xf32>, vector<10x32xf32>, vector<1x32xf32> -> vector<1x32xf32>
    %cst_14 = arith.constant 0.699999988 : f32
    %32 = vector.broadcast %cst_14 : f32 to vector<1x32xf32>
    %33 = arith.mulf %31, %32 : vector<1x32xf32>
    %c0_15 = arith.constant 0 : index
    %c0_16 = arith.constant 0 : index
    %34 = vector.load %arg3[%c0_15, %c0_16] : memref<96x32xf32, #tpu.memory_space<vmem>>, vector<32x32xf32>
    %cst_17 = arith.constant dense<0.000000e+00> : vector<1x32xf32>
    %35 = tpu.matmul %13, %34, %cst_17 {dimension_numbers = #tpu.dot_dimension_numbers<[1], [0], [0], [1], [0, 0, 1, 1], [], []>} : vector<1x32xf32>, vector<32x32xf32>, vector<1x32xf32> -> vector<1x32xf32>
    %c32 = arith.constant 32 : index
    %c0_18 = arith.constant 0 : index
    %36 = vector.load %arg3[%c32, %c0_18] : memref<96x32xf32, #tpu.memory_space<vmem>>, vector<32x32xf32>
    %cst_19 = arith.constant dense<0.000000e+00> : vector<1x32xf32>
    %37 = tpu.matmul %23, %36, %cst_19 {dimension_numbers = #tpu.dot_dimension_numbers<[1], [0], [0], [1], [0, 0, 1, 1], [], []>} : vector<1x32xf32>, vector<32x32xf32>, vector<1x32xf32> -> vector<1x32xf32>
    %38 = arith.addf %35, %37 : vector<1x32xf32>
    %c64 = arith.constant 64 : index
    %c0_20 = arith.constant 0 : index
    %39 = vector.load %arg3[%c64, %c0_20] : memref<96x32xf32, #tpu.memory_space<vmem>>, vector<32x32xf32>
    %cst_21 = arith.constant dense<0.000000e+00> : vector<1x32xf32>
    %40 = tpu.matmul %33, %39, %cst_21 {dimension_numbers = #tpu.dot_dimension_numbers<[1], [0], [0], [1], [0, 0, 1, 1], [], []>} : vector<1x32xf32>, vector<32x32xf32>, vector<1x32xf32> -> vector<1x32xf32>
    %41 = arith.addf %38, %40 : vector<1x32xf32>
    %c0_22 = arith.constant 0 : index
    %c0_23 = arith.constant 0 : index
    %42 = vector.load %arg4[%c0_22, %c0_23] : memref<1x32xf32, #tpu.memory_space<vmem>>, vector<1x32xf32>
    %43 = arith.addf %41, %42 : vector<1x32xf32>
    %c0_24 = arith.constant 0 : index
    %c0_25 = arith.constant 0 : index
    %44 = vector.load %arg5[%c0_24, %c0_25] : memref<64x32xf32, #tpu.memory_space<vmem>>, vector<32x32xf32>
    %cst_26 = arith.constant dense<0.000000e+00> : vector<1x32xf32>
    %45 = tpu.matmul %43, %44, %cst_26 {dimension_numbers = #tpu.dot_dimension_numbers<[1], [0], [0], [1], [0, 0, 1, 1], [], []>} : vector<1x32xf32>, vector<32x32xf32>, vector<1x32xf32> -> vector<1x32xf32>
    %c32_27 = arith.constant 32 : index
    %c0_28 = arith.constant 0 : index
    %46 = vector.load %arg5[%c32_27, %c0_28] : memref<64x32xf32, #tpu.memory_space<vmem>>, vector<32x32xf32>
    %cst_29 = arith.constant dense<0.000000e+00> : vector<1x32xf32>
    %47 = tpu.matmul %3, %46, %cst_29 {dimension_numbers = #tpu.dot_dimension_numbers<[1], [0], [0], [1], [0, 0, 1, 1], [], []>} : vector<1x32xf32>, vector<32x32xf32>, vector<1x32xf32> -> vector<1x32xf32>
    %48 = arith.addf %45, %47 : vector<1x32xf32>
    %c0_30 = arith.constant 0 : index
    %c0_31 = arith.constant 0 : index
    %49 = vector.load %arg6[%c0_30, %c0_31] : memref<1x32xf32, #tpu.memory_space<vmem>>, vector<1x32xf32>
    %50 = arith.addf %48, %49 : vector<1x32xf32>
    %c0_32 = arith.constant 0 : index
    %c0_33 = arith.constant 0 : index
    %51 = vector.load %arg7[%c0_32, %c0_33] : memref<32x8xf32, #tpu.memory_space<vmem>>, vector<32x8xf32>
    %cst_34 = arith.constant dense<0.000000e+00> : vector<1x8xf32>
    %52 = tpu.matmul %50, %51, %cst_34 {dimension_numbers = #tpu.dot_dimension_numbers<[1], [0], [0], [1], [0, 0, 1, 1], [], []>} : vector<1x32xf32>, vector<32x8xf32>, vector<1x8xf32> -> vector<1x8xf32>
    %c0_35 = arith.constant 0 : index
    %c0_36 = arith.constant 0 : index
    %53 = vector.load %arg8[%c0_35, %c0_36] : memref<1x8xf32, #tpu.memory_space<vmem>>, vector<1x8xf32>
    %54 = arith.addf %52, %53 : vector<1x8xf32>
    %c0_37 = arith.constant 0 : index
    %c0_38 = arith.constant 0 : index
    %55 = vector.load %arg9[%c0_37, %c0_38] : memref<8x64xf32, #tpu.memory_space<vmem>>, vector<8x64xf32>
    %cst_39 = arith.constant dense<0.000000e+00> : vector<1x64xf32>
    %56 = tpu.matmul %54, %55, %cst_39 {dimension_numbers = #tpu.dot_dimension_numbers<[1], [0], [0], [1], [0, 0, 1, 1], [], []>} : vector<1x8xf32>, vector<8x64xf32>, vector<1x64xf32> -> vector<1x64xf32>
    %c0_40 = arith.constant 0 : index
    %c0_41 = arith.constant 0 : index
    %57 = vector.load %arg10[%c0_40, %c0_41] : memref<64x32xf32, #tpu.memory_space<vmem>>, vector<64x32xf32>
    %cst_42 = arith.constant dense<0.000000e+00> : vector<1x32xf32>
    %58 = tpu.matmul %56, %57, %cst_42 {dimension_numbers = #tpu.dot_dimension_numbers<[1], [0], [0], [1], [0, 0, 1, 1], [], []>} : vector<1x64xf32>, vector<64x32xf32>, vector<1x32xf32> -> vector<1x32xf32>
    %c0_43 = arith.constant 0 : index
    %c0_44 = arith.constant 0 : index
    %59 = vector.load %arg11[%c0_43, %c0_44] : memref<1x32xf32, #tpu.memory_space<vmem>>, vector<1x32xf32>
    %60 = arith.addf %58, %59 : vector<1x32xf32>
    %c0_45 = arith.constant 0 : index
    %c0_46 = arith.constant 0 : index
    %61 = vector.load %arg10[%c0_45, %c0_46] : memref<64x32xf32, #tpu.memory_space<vmem>>, vector<32x32xf32>
    %cst_47 = arith.constant dense<0.000000e+00> : vector<1x32xf32>
    %62 = tpu.matmul %43, %61, %cst_47 {dimension_numbers = #tpu.dot_dimension_numbers<[1], [0], [0], [1], [0, 0, 1, 1], [], []>} : vector<1x32xf32>, vector<32x32xf32>, vector<1x32xf32> -> vector<1x32xf32>
    %c32_48 = arith.constant 32 : index
    %c0_49 = arith.constant 0 : index
    %63 = vector.load %arg10[%c32_48, %c0_49] : memref<64x32xf32, #tpu.memory_space<vmem>>, vector<32x32xf32>
    %cst_50 = arith.constant dense<0.000000e+00> : vector<1x32xf32>
    %64 = tpu.matmul %60, %63, %cst_50 {dimension_numbers = #tpu.dot_dimension_numbers<[1], [0], [0], [1], [0, 0, 1, 1], [], []>} : vector<1x32xf32>, vector<32x32xf32>, vector<1x32xf32> -> vector<1x32xf32>
    %65 = arith.addf %62, %64 : vector<1x32xf32>
    %c0_51 = arith.constant 0 : index
    %c0_52 = arith.constant 0 : index
    %66 = vector.load %arg11[%c0_51, %c0_52] : memref<1x32xf32, #tpu.memory_space<vmem>>, vector<1x32xf32>
    %67 = arith.addf %65, %66 : vector<1x32xf32>
    %cst_53 = arith.constant 0.000000e+00 : f32
    %68 = vector.broadcast %cst_53 : f32 to vector<1x32xf32>
    %69 = arith.maximumf %67, %68 : vector<1x32xf32>
    %c0_54 = arith.constant 0 : index
    %c0_55 = arith.constant 0 : index
    %70 = vector.load %arg12[%c0_54, %c0_55] : memref<32x128xf32, #tpu.memory_space<vmem>>, vector<32x128xf32>
    %cst_56 = arith.constant dense<0.000000e+00> : vector<1x128xf32>
    %71 = tpu.matmul %69, %70, %cst_56 {dimension_numbers = #tpu.dot_dimension_numbers<[1], [0], [0], [1], [0, 0, 1, 1], [], []>} : vector<1x32xf32>, vector<32x128xf32>, vector<1x128xf32> -> vector<1x128xf32>
    %c0_57 = arith.constant 0 : index
    %c0_58 = arith.constant 0 : index
    %72 = vector.load %arg13[%c0_57, %c0_58] : memref<32x128xf32, #tpu.memory_space<vmem>>, vector<32x128xf32>
    %cst_59 = arith.constant dense<0.000000e+00> : vector<1x128xf32>
    %73 = tpu.matmul %3, %72, %cst_59 {dimension_numbers = #tpu.dot_dimension_numbers<[1], [0], [0], [1], [0, 0, 1, 1], [], []>} : vector<1x32xf32>, vector<32x128xf32>, vector<1x128xf32> -> vector<1x128xf32>
    %74 = arith.addf %71, %73 : vector<1x128xf32>
    %c0_60 = arith.constant 0 : index
    %c0_61 = arith.constant 0 : index
    %75 = vector.load %arg14[%c0_60, %c0_61] : memref<1x128xf32, #tpu.memory_space<vmem>>, vector<1x128xf32>
    %76 = arith.addf %74, %75 : vector<1x128xf32>
    %77 = vector.extract_strided_slice %76 {offsets = [0, 0], sizes = [1, 32], strides = [1, 1]} : vector<1x128xf32> to vector<1x32xf32>
    %78 = arith.negf %77 : vector<1x32xf32>
    %79 = math.exp %78 : vector<1x32xf32>
    %cst_62 = arith.constant 1.000000e+00 : f32
    %80 = vector.broadcast %cst_62 : f32 to vector<1x32xf32>
    %81 = arith.addf %80, %79 : vector<1x32xf32>
    %82 = arith.divf %80, %81 : vector<1x32xf32>
    %83 = vector.extract_strided_slice %76 {offsets = [0, 32], sizes = [1, 32], strides = [1, 1]} : vector<1x128xf32> to vector<1x32xf32>
    %84 = arith.negf %83 : vector<1x32xf32>
    %85 = math.exp %84 : vector<1x32xf32>
    %cst_63 = arith.constant 1.000000e+00 : f32
    %86 = vector.broadcast %cst_63 : f32 to vector<1x32xf32>
    %87 = arith.addf %86, %85 : vector<1x32xf32>
    %88 = arith.divf %86, %87 : vector<1x32xf32>
    %89 = vector.extract_strided_slice %76 {offsets = [0, 64], sizes = [1, 32], strides = [1, 1]} : vector<1x128xf32> to vector<1x32xf32>
    %90 = math.tanh %89 : vector<1x32xf32>
    %91 = vector.extract_strided_slice %76 {offsets = [0, 96], sizes = [1, 32], strides = [1, 1]} : vector<1x128xf32> to vector<1x32xf32>
    %92 = arith.negf %91 : vector<1x32xf32>
    %93 = math.exp %92 : vector<1x32xf32>
    %cst_64 = arith.constant 1.000000e+00 : f32
    %94 = vector.broadcast %cst_64 : f32 to vector<1x32xf32>
    %95 = arith.addf %94, %93 : vector<1x32xf32>
    %96 = arith.divf %94, %95 : vector<1x32xf32>
    %97 = arith.mulf %88, %4 : vector<1x32xf32>
    %98 = arith.mulf %82, %90 : vector<1x32xf32>
    %99 = arith.addf %97, %98 : vector<1x32xf32>
    %100 = math.tanh %99 : vector<1x32xf32>
    %101 = arith.mulf %96, %100 : vector<1x32xf32>
    %c0_65 = arith.constant 0 : index
    %c0_66 = arith.constant 0 : index
    %102 = vector.load %arg17[%c0_65, %c0_66] : memref<32x10xf32, #tpu.memory_space<vmem>>, vector<32x10xf32>
    %cst_67 = arith.constant dense<0.000000e+00> : vector<1x10xf32>
    %103 = tpu.matmul %101, %102, %cst_67 {dimension_numbers = #tpu.dot_dimension_numbers<[1], [0], [0], [1], [0, 0, 1, 1], [], []>} : vector<1x32xf32>, vector<32x10xf32>, vector<1x10xf32> -> vector<1x10xf32>
    %c0_68 = arith.constant 0 : index
    %c0_69 = arith.constant 0 : index
    %104 = vector.load %arg18[%c0_68, %c0_69] : memref<1x10xf32, #tpu.memory_space<vmem>>, vector<1x10xf32>
    %105 = arith.addf %103, %104 : vector<1x10xf32>
    %cst_70 = arith.constant dense<0xFF800000> : vector<1xf32>
    %106 = vector.multi_reduction <maximumf>, %105, %cst_70 [1] : vector<1x10xf32> to vector<1xf32>
    %107 = vector.shape_cast %106 : vector<1xf32> to vector<1x1xf32>
    %108 = vector.broadcast %107 : vector<1x1xf32> to vector<1x10xf32>
    %109 = arith.subf %105, %108 : vector<1x10xf32>
    %110 = math.exp %109 : vector<1x10xf32>
    %cst_71 = arith.constant dense<0.000000e+00> : vector<1xf32>
    %111 = vector.multi_reduction <add>, %110, %cst_71 [1] : vector<1x10xf32> to vector<1xf32>
    %112 = vector.shape_cast %111 : vector<1xf32> to vector<1x1xf32>
    %113 = math.log %112 : vector<1x1xf32>
    %114 = arith.addf %107, %113 : vector<1x1xf32>
    %115 = vector.broadcast %114 : vector<1x1xf32> to vector<1x10xf32>
    %116 = arith.subf %105, %115 : vector<1x10xf32>
    %117 = tpu.concatenate %101, %99, %116 in 1 : vector<1x32xf32>, vector<1x32xf32>, vector<1x10xf32> -> vector<1x74xf32>
    %c0_72 = arith.constant 0 : index
    %c0_73 = arith.constant 0 : index
    %c0_74 = arith.constant 0 : index
    %118 = vector.load %arg19[%c0_72, %c0_73, %c0_74] : memref<1x1x74xf32, #tpu.memory_space<vmem>>, vector<1x1x74xf32>
    %119 = vector.shape_cast %118 : vector<1x1x74xf32> to vector<1x74xf32>
    %120 = vector.shape_cast %117 : vector<1x74xf32> to vector<1x1x74xf32>
    tpu.vector_store %arg19[%c0_72, %c0_73, %c0_74], %120 {strides = array<i32>} : memref<1x1x74xf32, #tpu.memory_space<vmem>>, vector<1x1x74xf32>,
    %c0_75 = arith.constant 0 : index
    %c0_76 = arith.constant 0 : index
    %121 = vector.load %arg20[%c0_75, %c0_76] : memref<1x32xf32, #tpu.memory_space<vmem>>, vector<1x32xf32>
    tpu.vector_store %arg20[%c0_75, %c0_76], %101 {strides = array<i32>} : memref<1x32xf32, #tpu.memory_space<vmem>>, vector<1x32xf32>,
    %c0_77 = arith.constant 0 : index
    %c0_78 = arith.constant 0 : index
    %122 = vector.load %arg21[%c0_77, %c0_78] : memref<1x32xf32, #tpu.memory_space<vmem>>, vector<1x32xf32>
    tpu.vector_store %arg21[%c0_77, %c0_78], %99 {strides = array<i32>} : memref<1x32xf32, #tpu.memory_space<vmem>>, vector<1x32xf32>,
    return
  }
  func.func @transform_0(%arg0: i32, %arg1: memref<4x3xi32, #tpu.memory_space<smem>>) -> (i32, i32) {
    %c0_i32 = arith.constant 0 : i32
    %c0_i32_0 = arith.constant 0 : i32
    %c0_i32_1 = arith.constant 0 : i32
    return %c0_i32, %c0_i32_0 : i32, i32
  }
  func.func @transform_1(%arg0: i32, %arg1: memref<4x3xi32, #tpu.memory_space<smem>>) -> (i32, i32) {
    %c0_i32 = arith.constant 0 : i32
    %c0_i32_0 = arith.constant 0 : i32
    %c0_i32_1 = arith.constant 0 : i32
    return %c0_i32, %c0_i32_0 : i32, i32
  }
  func.func @transform_2(%arg0: i32, %arg1: memref<4x3xi32, #tpu.memory_space<smem>>) -> (i32, i32) {
    %c0_i32 = arith.constant 0 : i32
    %c0_i32_0 = arith.constant 0 : i32
    %c0_i32_1 = arith.constant 0 : i32
    return %c0_i32, %c0_i32_0 : i32, i32
  }
  func.func @transform_3(%arg0: i32, %arg1: memref<4x3xi32, #tpu.memory_space<smem>>) -> (i32, i32) {
    %c0_i32 = arith.constant 0 : i32
    %c0_i32_0 = arith.constant 0 : i32
    %c0_i32_1 = arith.constant 0 : i32
    return %c0_i32, %c0_i32_0 : i32, i32
  }
  func.func @transform_4(%arg0: i32, %arg1: memref<4x3xi32, #tpu.memory_space<smem>>) -> (i32, i32) {
    %c0_i32 = arith.constant 0 : i32
    %c0_i32_0 = arith.constant 0 : i32
    %c0_i32_1 = arith.constant 0 : i32
    return %c0_i32, %c0_i32_0 : i32, i32
  }
  func.func @transform_5(%arg0: i32, %arg1: memref<4x3xi32, #tpu.memory_space<smem>>) -> (i32, i32) {
    %c0_i32 = arith.constant 0 : i32
    %c0_i32_0 = arith.constant 0 : i32
    %c0_i32_1 = arith.constant 0 : i32
    return %c0_i32, %c0_i32_0 : i32, i32
  }
  func.func @transform_6(%arg0: i32, %arg1: memref<4x3xi32, #tpu.memory_space<smem>>) -> (i32, i32) {
    %c0_i32 = arith.constant 0 : i32
    %c0_i32_0 = arith.constant 0 : i32
    %c0_i32_1 = arith.constant 0 : i32
    return %c0_i32, %c0_i32_0 : i32, i32
  }
  func.func @transform_7(%arg0: i32, %arg1: memref<4x3xi32, #tpu.memory_space<smem>>) -> (i32, i32) {
    %c0_i32 = arith.constant 0 : i32
    %c0_i32_0 = arith.constant 0 : i32
    %c0_i32_1 = arith.constant 0 : i32
    return %c0_i32, %c0_i32_0 : i32, i32
  }
  func.func @transform_8(%arg0: i32, %arg1: memref<4x3xi32, #tpu.memory_space<smem>>) -> (i32, i32) {
    %c0_i32 = arith.constant 0 : i32
    %c0_i32_0 = arith.constant 0 : i32
    %c0_i32_1 = arith.constant 0 : i32
    return %c0_i32, %c0_i32_0 : i32, i32
  }
  func.func @transform_9(%arg0: i32, %arg1: memref<4x3xi32, #tpu.memory_space<smem>>) -> (i32, i32) {
    %c0_i32 = arith.constant 0 : i32
    %c0_i32_0 = arith.constant 0 : i32
    %c0_i32_1 = arith.constant 0 : i32
    return %c0_i32, %c0_i32_0 : i32, i32
  }
  func.func @transform_10(%arg0: i32, %arg1: memref<4x3xi32, #tpu.memory_space<smem>>) -> (i32, i32) {
    %c0_i32 = arith.constant 0 : i32
    %c0_i32_0 = arith.constant 0 : i32
    %c0_i32_1 = arith.constant 0 : i32
    return %c0_i32, %c0_i32_0 : i32, i32
  }
  func.func @transform_11(%arg0: i32, %arg1: memref<4x3xi32, #tpu.memory_space<smem>>) -> (i32, i32) {
    %c0_i32 = arith.constant 0 : i32
    %c0_i32_0 = arith.constant 0 : i32
    %c0_i32_1 = arith.constant 0 : i32
    return %c0_i32, %c0_i32_0 : i32, i32
  }
  func.func @transform_12(%arg0: i32, %arg1: memref<4x3xi32, #tpu.memory_space<smem>>) -> (i32, i32) {
    %c0_i32 = arith.constant 0 : i32
    %c0_i32_0 = arith.constant 0 : i32
    %c0_i32_1 = arith.constant 0 : i32
    return %c0_i32, %c0_i32_0 : i32, i32
  }
  func.func @transform_13(%arg0: i32, %arg1: memref<4x3xi32, #tpu.memory_space<smem>>) -> (i32, i32) {
    %c0_i32 = arith.constant 0 : i32
    %c0_i32_0 = arith.constant 0 : i32
    %c0_i32_1 = arith.constant 0 : i32
    return %c0_i32, %c0_i32_0 : i32, i32
  }
  func.func @transform_14(%arg0: i32, %arg1: memref<4x3xi32, #tpu.memory_space<smem>>) -> (i32, i32) {
    %c0_i32 = arith.constant 0 : i32
    %c0_i32_0 = arith.constant 0 : i32
    %c0_i32_1 = arith.constant 0 : i32
    return %c0_i32, %c0_i32_0 : i32, i32
  }
  func.func @transform_15(%arg0: i32, %arg1: memref<4x3xi32, #tpu.memory_space<smem>>) -> (i32, i32) {
    %c0_i32 = arith.constant 0 : i32
    %c0_i32_0 = arith.constant 0 : i32
    %c0_i32_1 = arith.constant 0 : i32
    return %c0_i32, %c0_i32_0 : i32, i32
  }
  func.func @transform_16(%arg0: i32, %arg1: memref<4x3xi32, #tpu.memory_space<smem>>) -> (i32, i32) {
    %c0_i32 = arith.constant 0 : i32
    %c0_i32_0 = arith.constant 0 : i32
    %c0_i32_1 = arith.constant 0 : i32
    return %c0_i32, %c0_i32_0 : i32, i32
  }
  func.func @transform_17(%arg0: i32, %arg1: memref<4x3xi32, #tpu.memory_space<smem>>) -> (i32, i32, i32) {
    %c0_i32 = arith.constant 0 : i32
    %c0_i32_0 = arith.constant 0 : i32
    %c0_i32_1 = arith.constant 0 : i32
    return %arg0, %c0_i32, %c0_i32_0 : i32, i32, i32
  }
}

</mosaic_0001>

<llo_original>
// kernel: _fused_decode.1
$region0: #{_fused_decode.1}
  #allocation0 [shape = 'u32[]', space=smem, size = 0x4, offset = 0x4, fixed_abs, tag = 'smem constant byte address 0x4 - core index']
  #allocation1 [shape = 'u32[144,128]{1,0:T(1,128)}', space=vmem, size = 0x12000, scoped, tag = 'internal scratch']
  #allocation2 [shape = 'f32[1,32]{1,0:T(1,128)}', space=vmem, size = 0x200, scoped, tag = 'scratch operand']
  #allocation3 [shape = 'f32[1,32]{1,0:T(1,128)}', space=vmem, size = 0x200, scoped, tag = 'scratch operand']
  #allocation4 [shape = 's32[1]{0}', space=sflag, size = 0x4, scoped, tag = 'scoped memory for _fused_decode.1']
  #allocation5 [shape = 'u8[2048]{0}', space=smem, size = 0x800, scoped, tag = 'prefetched SMEM operand 0']
  %s0 = inlined_call_operand.vmem [shape: s32[4,3], index: 0, kind: input, shape index: {}]
  %s1 = inlined_call_operand.vmem [shape: f32[10,32], index: 1, kind: input, shape index: {}]
  %s2 = inlined_call_operand.vmem [shape: f32[96,32], index: 2, kind: input, shape index: {}]
  %s3 = inlined_call_operand.vmem [shape: f32[1,32], index: 3, kind: input, shape index: {}]
  %s4 = inlined_call_operand.vmem [shape: f32[64,32], index: 4, kind: input, shape index: {}]
  %s5 = inlined_call_operand.vmem [shape: f32[1,32], index: 5, kind: input, shape index: {}]
  %s6 = inlined_call_operand.vmem [shape: f32[32,8], index: 6, kind: input, shape index: {}]
  %s7 = inlined_call_operand.vmem [shape: f32[1,8], index: 7, kind: input, shape index: {}]
  %s8 = inlined_call_operand.vmem [shape: f32[8,64], index: 8, kind: input, shape index: {}]
  %s9 = inlined_call_operand.vmem [shape: f32[64,32], index: 9, kind: input, shape index: {}]
  %s10 = inlined_call_operand.vmem [shape: f32[1,32], index: 10, kind: input, shape index: {}]
  %s11 = inlined_call_operand.vmem [shape: f32[32,128], index: 11, kind: input, shape index: {}]
  %s12 = inlined_call_operand.vmem [shape: f32[32,128], index: 12, kind: input, shape index: {}]
  %s13 = inlined_call_operand.vmem [shape: f32[1,128], index: 13, kind: input, shape index: {}]
  %s14 = inlined_call_operand.vmem [shape: f32[1,32], index: 14, kind: input, shape index: {}]
  %s15 = inlined_call_operand.vmem [shape: f32[1,32], index: 15, kind: input, shape index: {}]
  %s16 = inlined_call_operand.vmem [shape: f32[32,10], index: 16, kind: input, shape index: {}]
  %s17 = inlined_call_operand.vmem [shape: f32[1,10], index: 17, kind: input, shape index: {}]
  %s18 = inlined_call_operand.vmem [shape: f32[4,1,74], index: 18, kind: output, shape index: {}]
  %s19 = sld [smem:[#allocation0]]
  $region105: #{_fused_decode.1} parent=0
    _
  %s21 = ssub.s32 1, %s19
  %s22 = scalar_select 0, %s21, %s19
  %s23 = sshll.u32 %s0, 4
  %s24 = int_to_ptr.vmem [resolvable:$true] %s23
  %26 = dma.vmem_to_smem %s24, 64, [#allocation5], [#allocation4]
  %27 = dma.done [#allocation4], 64
  %28 = sfence
  loop: start=0, step=1, limit=6
  $region2: #{_fused_decode.1} parent=0 // loop_pre_header
    _
  $region3: #{_fused_decode.1} parent=0 // loop_header
    %s30 = sphi 0, %s34
    %p31 = scmp.ge.s32.totalorder %s30, 6
    %s38 = sphi 0, %s38
    %s40 = sphi 0, %s38
    %s41 = sphi 0, %s40
    %s55 = sphi 0, %s41
    %s59 = sphi 0, %s59
    %s61 = sphi 0, %s59
    %s62 = sphi 0, %s61
    %s76 = sphi 0, %s62
    %s80 = sphi 0, %s80
    %s82 = sphi 0, %s80
    %s83 = sphi 0, %s82
    %s97 = sphi 0, %s83
    %s101 = sphi 0, %s101
    %s103 = sphi 0, %s101
    %s104 = sphi 0, %s103
    %s118 = sphi 0, %s104
    %s122 = sphi 0, %s122
    %s124 = sphi 0, %s122
    %s125 = sphi 0, %s124
    %s139 = sphi 0, %s125
    %s143 = sphi 0, %s143
    %s145 = sphi 0, %s143
    %s146 = sphi 0, %s145
    %s160 = sphi 0, %s146
    %s164 = sphi 0, %s164
    %s166 = sphi 0, %s164
    %s167 = sphi 0, %s166
    %s181 = sphi 0, %s167
    %s185 = sphi 0, %s185
    %s187 = sphi 0, %s185
    %s188 = sphi 0, %s187
    %s202 = sphi 0, %s188
    %s206 = sphi 0, %s206
    %s208 = sphi 0, %s206
    %s209 = sphi 0, %s208
    %s223 = sphi 0, %s209
    %s227 = sphi 0, %s227
    %s229 = sphi 0, %s227
    %s230 = sphi 0, %s229
    %s244 = sphi 0, %s230
    %s248 = sphi 0, %s248
    %s250 = sphi 0, %s248
    %s251 = sphi 0, %s250
    %s265 = sphi 0, %s251
    %s269 = sphi 0, %s269
    %s271 = sphi 0, %s269
    %s272 = sphi 0, %s271
    %s286 = sphi 0, %s272
    %s290 = sphi 0, %s290
    %s292 = sphi 0, %s290
    %s293 = sphi 0, %s292
    %s307 = sphi 0, %s293
    %s311 = sphi 0, %s311
    %s313 = sphi 0, %s311
    %s314 = sphi 0, %s313
    %s328 = sphi 0, %s314
    %s332 = sphi 0, %s332
    %s334 = sphi 0, %s332
    %s335 = sphi 0, %s334
    %s349 = sphi 0, %s335
    %s353 = sphi 0, %s353
    %s355 = sphi 0, %s353
    %s356 = sphi 0, %s355
    %s370 = sphi 0, %s356
    %s374 = sphi 0, %s374
    %s376 = sphi 0, %s374
    %s377 = sphi 0, %s376
    %s391 = sphi 0, %s377
    %s397 = sphi 0, %s399
    %s400 = sphi 0, %s397
    %s401 = sphi 0, %s400
    %s417 = sphi 0, %s401
  $region4: #{_fused_decode.1} parent=0 // loop_header_branch
    %33 = sbr.rel (%p31) target = $region8
  $region5: #{_fused_decode.1} parent=0 // loop_body
    %s35 = ssub.s32 %s30, 1
    %s36 = ssub.s32 %s30, 2
    %s37 = sadd.s32 %s30, 1
    %s39 = sadd.s32 %s38, 1
    %p42 = scmp.eq.s32.totalorder %s30, 3
    %p43 = scmp.ne.s32.totalorder %s38, %s40
    %p44 = scmp.eq.s32.totalorder %s30, 0
    %p45 = por %p43, %p44
    %p46 = scmp.ne.s32.totalorder %s38, %s40
    %p47 = scmp.eq.s32.totalorder %s35, 3
    %p48 = por %p46, %p47
    %p49 = scmp.ne.s32.totalorder %s40, %s41
    %p50 = scmp.eq.s32.totalorder %s35, 0
    %p51 = por %p49, %p50
    %p52 = scmp.ne.s32.totalorder %s40, %s41
    %p53 = scmp.eq.s32.totalorder %s36, 3
    %p54 = por %p52, %p53
    %p56 = scmp.ne.s32.totalorder %s41, %s55
    %p57 = scmp.eq.s32.totalorder %s36, 0
    %p58 = por %p56, %p57
    %s60 = sadd.s32 %s59, 1
    %p63 = scmp.eq.s32.totalorder %s30, 3
    %p64 = scmp.ne.s32.totalorder %s59, %s61
    %p65 = scmp.eq.s32.totalorder %s30, 0
    %p66 = por %p64, %p65
    %p67 = scmp.ne.s32.totalorder %s59, %s61
    %p68 = scmp.eq.s32.totalorder %s35, 3
    %p69 = por %p67, %p68
    %p70 = scmp.ne.s32.totalorder %s61, %s62
    %p71 = scmp.eq.s32.totalorder %s35, 0
    %p72 = por %p70, %p71
    %p73 = scmp.ne.s32.totalorder %s61, %s62
    %p74 = scmp.eq.s32.totalorder %s36, 3
    %p75 = por %p73, %p74
    %p77 = scmp.ne.s32.totalorder %s62, %s76
    %p78 = scmp.eq.s32.totalorder %s36, 0
    %p79 = por %p77, %p78
    %s81 = sadd.s32 %s80, 1
    %p84 = scmp.eq.s32.totalorder %s30, 3
    %p85 = scmp.ne.s32.totalorder %s80, %s82
    %p86 = scmp.eq.s32.totalorder %s30, 0
    %p87 = por %p85, %p86
    %p88 = scmp.ne.s32.totalorder %s80, %s82
    %p89 = scmp.eq.s32.totalorder %s35, 3
    %p90 = por %p88, %p89
    %p91 = scmp.ne.s32.totalorder %s82, %s83
    %p92 = scmp.eq.s32.totalorder %s35, 0
    %p93 = por %p91, %p92
    %p94 = scmp.ne.s32.totalorder %s82, %s83
    %p95 = scmp.eq.s32.totalorder %s36, 3
    %p96 = por %p94, %p95
    %p98 = scmp.ne.s32.totalorder %s83, %s97
    %p99 = scmp.eq.s32.totalorder %s36, 0
    %p100 = por %p98, %p99
    %s102 = sadd.s32 %s101, 1
    %p105 = scmp.eq.s32.totalorder %s30, 3
    %p106 = scmp.ne.s32.totalorder %s101, %s103
    %p107 = scmp.eq.s32.totalorder %s30, 0
    %p108 = por %p106, %p107
    %p109 = scmp.ne.s32.totalorder %s101, %s103
    %p110 = scmp.eq.s32.totalorder %s35, 3
    %p111 = por %p109, %p110
    %p112 = scmp.ne.s32.totalorder %s103, %s104
    %p113 = scmp.eq.s32.totalorder %s35, 0
    %p114 = por %p112, %p113
    %p115 = scmp.ne.s32.totalorder %s103, %s104
    %p116 = scmp.eq.s32.totalorder %s36, 3
    %p117 = por %p115, %p116
    %p119 = scmp.ne.s32.totalorder %s104, %s118
    %p120 = scmp.eq.s32.totalorder %s36, 0
    %p121 = por %p119, %p120
    %s123 = sadd.s32 %s122, 1
    %p126 = scmp.eq.s32.totalorder %s30, 3
    %p127 = scmp.ne.s32.totalorder %s122, %s124
    %p128 = scmp.eq.s32.totalorder %s30, 0
    %p129 = por %p127, %p128
    %p130 = scmp.ne.s32.totalorder %s122, %s124
    %p131 = scmp.eq.s32.totalorder %s35, 3
    %p132 = por %p130, %p131
    %p133 = scmp.ne.s32.totalorder %s124, %s125
    %p134 = scmp.eq.s32.totalorder %s35, 0
    %p135 = por %p133, %p134
    %p136 = scmp.ne.s32.totalorder %s124, %s125
    %p137 = scmp.eq.s32.totalorder %s36, 3
    %p138 = por %p136, %p137
    %p140 = scmp.ne.s32.totalorder %s125, %s139
    %p141 = scmp.eq.s32.totalorder %s36, 0
    %p142 = por %p140, %p141
    %s144 = sadd.s32 %s143, 1
    %p147 = scmp.eq.s32.totalorder %s30, 3
    %p148 = scmp.ne.s32.totalorder %s143, %s145
    %p149 = scmp.eq.s32.totalorder %s30, 0
    %p150 = por %p148, %p149
    %p151 = scmp.ne.s32.totalorder %s143, %s145
    %p152 = scmp.eq.s32.totalorder %s35, 3
    %p153 = por %p151, %p152
    %p154 = scmp.ne.s32.totalorder %s145, %s146
    %p155 = scmp.eq.s32.totalorder %s35, 0
    %p156 = por %p154, %p155
    %p157 = scmp.ne.s32.totalorder %s145, %s146
    %p158 = scmp.eq.s32.totalorder %s36, 3
    %p159 = por %p157, %p158
    %p161 = scmp.ne.s32.totalorder %s146, %s160
    %p162 = scmp.eq.s32.totalorder %s36, 0
    %p163 = por %p161, %p162
    %s165 = sadd.s32 %s164, 1
    %p168 = scmp.eq.s32.totalorder %s30, 3
    %p169 = scmp.ne.s32.totalorder %s164, %s166
    %p170 = scmp.eq.s32.totalorder %s30, 0
    %p171 = por %p169, %p170
    %p172 = scmp.ne.s32.totalorder %s164, %s166
    %p173 = scmp.eq.s32.totalorder %s35, 3
    %p174 = por %p172, %p173
    %p175 = scmp.ne.s32.totalorder %s166, %s167
    %p176 = scmp.eq.s32.totalorder %s35, 0
    %p177 = por %p175, %p176
    %p178 = scmp.ne.s32.totalorder %s166, %s167
    %p179 = scmp.eq.s32.totalorder %s36, 3
    %p180 = por %p178, %p179
    %p182 = scmp.ne.s32.totalorder %s167, %s181
    %p183 = scmp.eq.s32.totalorder %s36, 0
    %p184 = por %p182, %p183
    %s186 = sadd.s32 %s185, 1
    %p189 = scmp.eq.s32.totalorder %s30, 3
    %p190 = scmp.ne.s32.totalorder %s185, %s187
    %p191 = scmp.eq.s32.totalorder %s30, 0
    %p192 = por %p190, %p191
    %p193 = scmp.ne.s32.totalorder %s185, %s187
    %p194 = scmp.eq.s32.totalorder %s35, 3
    %p195 = por %p193, %p194
    %p196 = scmp.ne.s32.totalorder %s187, %s188
    %p197 = scmp.eq.s32.totalorder %s35, 0
    %p198 = por %p196, %p197
    %p199 = scmp.ne.s32.totalorder %s187, %s188
    %p200 = scmp.eq.s32.totalorder %s36, 3
    %p201 = por %p199, %p200
    %p203 = scmp.ne.s32.totalorder %s188, %s202
    %p204 = scmp.eq.s32.totalorder %s36, 0
    %p205 = por %p203, %p204
    %s207 = sadd.s32 %s206, 1
    %p210 = scmp.eq.s32.totalorder %s30, 3
    %p211 = scmp.ne.s32.totalorder %s206, %s208
    %p212 = scmp.eq.s32.totalorder %s30, 0
    %p213 = por %p211, %p212
    %p214 = scmp.ne.s32.totalorder %s206, %s208
    %p215 = scmp.eq.s32.totalorder %s35, 3
    %p216 = por %p214, %p215
    %p217 = scmp.ne.s32.totalorder %s208, %s209
    %p218 = scmp.eq.s32.totalorder %s35, 0
    %p219 = por %p217, %p218
    %p220 = scmp.ne.s32.totalorder %s208, %s209
    %p221 = scmp.eq.s32.totalorder %s36, 3
    %p222 = por %p220, %p221
    %p224 = scmp.ne.s32.totalorder %s209, %s223
    %p225 = scmp.eq.s32.totalorder %s36, 0
    %p226 = por %p224, %p225
    %s228 = sadd.s32 %s227, 1
    %p231 = scmp.eq.s32.totalorder %s30, 3
    %p232 = scmp.ne.s32.totalorder %s227, %s229
    %p233 = scmp.eq.s32.totalorder %s30, 0
    %p234 = por %p232, %p233
    %p235 = scmp.ne.s32.totalorder %s227, %s229
    %p236 = scmp.eq.s32.totalorder %s35, 3
    %p237 = por %p235, %p236
    %p238 = scmp.ne.s32.totalorder %s229, %s230
    %p239 = scmp.eq.s32.totalorder %s35, 0
    %p240 = por %p238, %p239
    %p241 = scmp.ne.s32.totalorder %s229, %s230
    %p242 = scmp.eq.s32.totalorder %s36, 3
    %p243 = por %p241, %p242
    %p245 = scmp.ne.s32.totalorder %s230, %s244
    %p246 = scmp.eq.s32.totalorder %s36, 0
    %p247 = por %p245, %p246
    %s249 = sadd.s32 %s248, 1
    %p252 = scmp.eq.s32.totalorder %s30, 3
    %p253 = scmp.ne.s32.totalorder %s248, %s250
    %p254 = scmp.eq.s32.totalorder %s30, 0
    %p255 = por %p253, %p254
    %p256 = scmp.ne.s32.totalorder %s248, %s250
    %p257 = scmp.eq.s32.totalorder %s35, 3
    %p258 = por %p256, %p257
    %p259 = scmp.ne.s32.totalorder %s250, %s251
    %p260 = scmp.eq.s32.totalorder %s35, 0
    %p261 = por %p259, %p260
    %p262 = scmp.ne.s32.totalorder %s250, %s251
    %p263 = scmp.eq.s32.totalorder %s36, 3
    %p264 = por %p262, %p263
    %p266 = scmp.ne.s32.totalorder %s251, %s265
    %p267 = scmp.eq.s32.totalorder %s36, 0
    %p268 = por %p266, %p267
    %s270 = sadd.s32 %s269, 1
    %p273 = scmp.eq.s32.totalorder %s30, 3
    %p274 = scmp.ne.s32.totalorder %s269, %s271
    %p275 = scmp.eq.s32.totalorder %s30, 0
    %p276 = por %p274, %p275
    %p277 = scmp.ne.s32.totalorder %s269, %s271
    %p278 = scmp.eq.s32.totalorder %s35, 3
    %p279 = por %p277, %p278
    %p280 = scmp.ne.s32.totalorder %s271, %s272
    %p281 = scmp.eq.s32.totalorder %s35, 0
    %p282 = por %p280, %p281
    %p283 = scmp.ne.s32.totalorder %s271, %s272
    %p284 = scmp.eq.s32.totalorder %s36, 3
    %p285 = por %p283, %p284
    %p287 = scmp.ne.s32.totalorder %s272, %s286
    %p288 = scmp.eq.s32.totalorder %s36, 0
    %p289 = por %p287, %p288
    %s291 = sadd.s32 %s290, 1
    %p294 = scmp.eq.s32.totalorder %s30, 3
    %p295 = scmp.ne.s32.totalorder %s290, %s292
    %p296 = scmp.eq.s32.totalorder %s30, 0
    %p297 = por %p295, %p296
    %p298 = scmp.ne.s32.totalorder %s290, %s292
    %p299 = scmp.eq.s32.totalorder %s35, 3
    %p300 = por %p298, %p299
    %p301 = scmp.ne.s32.totalorder %s292, %s293
    %p302 = scmp.eq.s32.totalorder %s35, 0
    %p303 = por %p301, %p302
    %p304 = scmp.ne.s32.totalorder %s292, %s293
    %p305 = scmp.eq.s32.totalorder %s36, 3
    %p306 = por %p304, %p305
    %p308 = scmp.ne.s32.totalorder %s293, %s307
    %p309 = scmp.eq.s32.totalorder %s36, 0
    %p310 = por %p308, %p309
    %s312 = sadd.s32 %s311, 1
    %p315 = scmp.eq.s32.totalorder %s30, 3
    %p316 = scmp.ne.s32.totalorder %s311, %s313
    %p317 = scmp.eq.s32.totalorder %s30, 0
    %p318 = por %p316, %p317
    %p319 = scmp.ne.s32.totalorder %s311, %s313
    %p320 = scmp.eq.s32.totalorder %s35, 3
    %p321 = por %p319, %p320
    %p322 = scmp.ne.s32.totalorder %s313, %s314
    %p323 = scmp.eq.s32.totalorder %s35, 0
    %p324 = por %p322, %p323
    %p325 = scmp.ne.s32.totalorder %s313, %s314
    %p326 = scmp.eq.s32.totalorder %s36, 3
    %p327 = por %p325, %p326
    %p329 = scmp.ne.s32.totalorder %s314, %s328
    %p330 = scmp.eq.s32.totalorder %s36, 0
    %p331 = por %p329, %p330
    %s333 = sadd.s32 %s332, 1
    %p336 = scmp.eq.s32.totalorder %s30, 3
    %p337 = scmp.ne.s32.totalorder %s332, %s334
    %p338 = scmp.eq.s32.totalorder %s30, 0
    %p339 = por %p337, %p338
    %p340 = scmp.ne.s32.totalorder %s332, %s334
    %p341 = scmp.eq.s32.totalorder %s35, 3
    %p342 = por %p340, %p341
    %p343 = scmp.ne.s32.totalorder %s334, %s335
    %p344 = scmp.eq.s32.totalorder %s35, 0
    %p345 = por %p343, %p344
    %p346 = scmp.ne.s32.totalorder %s334, %s335
    %p347 = scmp.eq.s32.totalorder %s36, 3
    %p348 = por %p346, %p347
    %p350 = scmp.ne.s32.totalorder %s335, %s349
    %p351 = scmp.eq.s32.totalorder %s36, 0
    %p352 = por %p350, %p351
    %s354 = sadd.s32 %s353, 1
    %p357 = scmp.eq.s32.totalorder %s30, 3
    %p358 = scmp.ne.s32.totalorder %s353, %s355
    %p359 = scmp.eq.s32.totalorder %s30, 0
    %p360 = por %p358, %p359
    %p361 = scmp.ne.s32.totalorder %s353, %s355
    %p362 = scmp.eq.s32.totalorder %s35, 3
    %p363 = por %p361, %p362
    %p364 = scmp.ne.s32.totalorder %s355, %s356
    %p365 = scmp.eq.s32.totalorder %s35, 0
    %p366 = por %p364, %p365
    %p367 = scmp.ne.s32.totalorder %s355, %s356
    %p368 = scmp.eq.s32.totalorder %s36, 3
    %p369 = por %p367, %p368
    %p371 = scmp.ne.s32.totalorder %s356, %s370
    %p372 = scmp.eq.s32.totalorder %s36, 0
    %p373 = por %p371, %p372
    %s375 = sadd.s32 %s374, 1
    %p378 = scmp.eq.s32.totalorder %s30, 3
    %p379 = scmp.ne.s32.totalorder %s374, %s376
    %p380 = scmp.eq.s32.totalorder %s30, 0
    %p381 = por %p379, %p380
    %p382 = scmp.ne.s32.totalorder %s374, %s376
    %p383 = scmp.eq.s32.totalorder %s35, 3
    %p384 = por %p382, %p383
    %p385 = scmp.ne.s32.totalorder %s376, %s377
    %p386 = scmp.eq.s32.totalorder %s35, 0
    %p387 = por %p385, %p386
    %p388 = scmp.ne.s32.totalorder %s376, %s377
    %p389 = scmp.eq.s32.totalorder %s36, 3
    %p390 = por %p388, %p389
    %p392 = scmp.ne.s32.totalorder %s377, %s391
    %p393 = scmp.eq.s32.totalorder %s36, 0
    %p394 = por %p392, %p393
    %s395 = ssub.s32 %s30, %s37
    %p396 = scmp.eq.s32.totalorder %s395, 0
    %s398 = sadd.s32 %s397, 1
    %s399 = scalar_select %p396, %s397, %s398
    %p402 = pneg %p396
    %p403 = scmp.eq.s32.totalorder %s30, 3
    %p404 = por %p402, %p403
    %p405 = scmp.ne.s32.totalorder %s397, %s400
    %p406 = scmp.eq.s32.totalorder %s30, 0
    %p407 = por %p405, %p406
    %p408 = scmp.ne.s32.totalorder %s397, %s400
    %p409 = scmp.eq.s32.totalorder %s35, 3
    %p410 = por %p408, %p409
    %p411 = scmp.ne.s32.totalorder %s400, %s401
    %p412 = scmp.eq.s32.totalorder %s35, 0
    %p413 = por %p411, %p412
    %p414 = scmp.ne.s32.totalorder %s400, %s401
    %p415 = scmp.eq.s32.totalorder %s36, 3
    %p416 = por %p414, %p415
    %p418 = scmp.ne.s32.totalorder %s401, %s417
    %p419 = scmp.eq.s32.totalorder %s36, 0
    %p420 = por %p418, %p419
    %p421 = scmp.le.s32.totalorder 1, %s30
    %p422 = scmp.lt.s32.totalorder %s30, 5
    %p423 = pnand %p421, %p422
    %p424 = pneg %p423
    // Predicated region
    $region9: #{_fused_decode.1} parent=5 // pred_check
      _
    $region10: #{_fused_decode.1} parent=5 // pred_check_branch
      %426 = sbr.rel (%p423) target = $region12
    $region11: #{_fused_decode.1} parent=5 // pred_region
      %s427 = ssub.s32 %s30, 1
      // Predicated region
      $region13: #{_fused_decode.1} parent=11 // pred_check
        %p428 = pneg %p51
      $region14: #{_fused_decode.1} parent=11 // pred_check_branch
        %430 = sbr.rel (%p428) target = $region16
      $region15: #{_fused_decode.1} parent=11 // pred_region
        _
      $region16: #{_fused_decode.1} parent=11 // pred_fallthru
        _
      // Predicated region
      $region17: #{_fused_decode.1} parent=11 // pred_check
        %p431 = pneg %p72
      $region18: #{_fused_decode.1} parent=11 // pred_check_branch
        %433 = sbr.rel (%p431) target = $region20
      $region19: #{_fused_decode.1} parent=11 // pred_region
        _
      $region20: #{_fused_decode.1} parent=11 // pred_fallthru
        _
      // Predicated region
      $region21: #{_fused_decode.1} parent=11 // pred_check
        %p434 = pneg %p93
      $region22: #{_fused_decode.1} parent=11 // pred_check_branch
        %436 = sbr.rel (%p434) target = $region24
      $region23: #{_fused_decode.1} parent=11 // pred_region
        _
      $region24: #{_fused_decode.1} parent=11 // pred_fallthru
        _
      // Predicated region
      $region25: #{_fused_decode.1} parent=11 // pred_check
        %p437 = pneg %p114
      $region26: #{_fused_decode.1} parent=11 // pred_check_branch
        %439 = sbr.rel (%p437) target = $region28
      $region27: #{_fused_decode.1} parent=11 // pred_region
        _
      $region28: #{_fused_decode.1} parent=11 // pred_fallthru
        _
      // Predicated region
      $region29: #{_fused_decode.1} parent=11 // pred_check
        %p440 = pneg %p135
      $region30: #{_fused_decode.1} parent=11 // pred_check_branch
        %442 = sbr.rel (%p440) target = $region32
      $region31: #{_fused_decode.1} parent=11 // pred_region
        _
      $region32: #{_fused_decode.1} parent=11 // pred_fallthru
        _
      // Predicated region
      $region33: #{_fused_decode.1} parent=11 // pred_check
        %p443 = pneg %p156
      $region34: #{_fused_decode.1} parent=11 // pred_check_branch
        %445 = sbr.rel (%p443) target = $region36
      $region35: #{_fused_decode.1} parent=11 // pred_region
        _
      $region36: #{_fused_decode.1} parent=11 // pred_fallthru
        _
      // Predicated region
      $region37: #{_fused_decode.1} parent=11 // pred_check
        %p446 = pneg %p177
      $region38: #{_fused_decode.1} parent=11 // pred_check_branch
        %448 = sbr.rel (%p446) target = $region40
      $region39: #{_fused_decode.1} parent=11 // pred_region
        _
      $region40: #{_fused_decode.1} parent=11 // pred_fallthru
        _
      // Predicated region
      $region41: #{_fused_decode.1} parent=11 // pred_check
        %p449 = pneg %p198
      $region42: #{_fused_decode.1} parent=11 // pred_check_branch
        %451 = sbr.rel (%p449) target = $region44
      $region43: #{_fused_decode.1} parent=11 // pred_region
        _
      $region44: #{_fused_decode.1} parent=11 // pred_fallthru
        _
      // Predicated region
      $region45: #{_fused_decode.1} parent=11 // pred_check
        %p452 = pneg %p219
      $region46: #{_fused_decode.1} parent=11 // pred_check_branch
        %454 = sbr.rel (%p452) target = $region48
      $region47: #{_fused_decode.1} parent=11 // pred_region
        _
      $region48: #{_fused_decode.1} parent=11 // pred_fallthru
        _
      // Predicated region
      $region49: #{_fused_decode.1} parent=11 // pred_check
        %p455 = pneg %p240
      $region50: #{_fused_decode.1} parent=11 // pred_check_branch
        %457 = sbr.rel (%p455) target = $region52
      $region51: #{_fused_decode.1} parent=11 // pred_region
        _
      $region52: #{_fused_decode.1} parent=11 // pred_fallthru
        _
      // Predicated region
      $region53: #{_fused_decode.1} parent=11 // pred_check
        %p458 = pneg %p261
      $region54: #{_fused_decode.1} parent=11 // pred_check_branch
        %460 = sbr.rel (%p458) target = $region56
      $region55: #{_fused_decode.1} parent=11 // pred_region
        _
      $region56: #{_fused_decode.1} parent=11 // pred_fallthru
        _
      // Predicated region
      $region57: #{_fused_decode.1} parent=11 // pred_check
        %p461 = pneg %p282
      $region58: #{_fused_decode.1} parent=11 // pred_check_branch
        %463 = sbr.rel (%p461) target = $region60
      $region59: #{_fused_decode.1} parent=11 // pred_region
        _
      $region60: #{_fused_decode.1} parent=11 // pred_fallthru
        _
      // Predicated region
      $region61: #{_fused_decode.1} parent=11 // pred_check
        %p464 = pneg %p303
      $region62: #{_fused_decode.1} parent=11 // pred_check_branch
        %466 = sbr.rel (%p464) target = $region64
      $region63: #{_fused_decode.1} parent=11 // pred_region
        _
      $region64: #{_fused_decode.1} parent=11 // pred_fallthru
        _
      // Predicated region
      $region65: #{_fused_decode.1} parent=11 // pred_check
        %p467 = pneg %p324
      $region66: #{_fused_decode.1} parent=11 // pred_check_branch
        %469 = sbr.rel (%p467) target = $region68
      $region67: #{_fused_decode.1} parent=11 // pred_region
        _
      $region68: #{_fused_decode.1} parent=11 // pred_fallthru
        _
      // Predicated region
      $region69: #{_fused_decode.1} parent=11 // pred_check
        %p470 = pneg %p345
      $region70: #{_fused_decode.1} parent=11 // pred_check_branch
        %472 = sbr.rel (%p470) target = $region72
      $region71: #{_fused_decode.1} parent=11 // pred_region
        _
      $region72: #{_fused_decode.1} parent=11 // pred_fallthru
        _
      // Predicated region
      $region73: #{_fused_decode.1} parent=11 // pred_check
        %p473 = pneg %p366
      $region74: #{_fused_decode.1} parent=11 // pred_check_branch
        %475 = sbr.rel (%p473) target = $region76
      $region75: #{_fused_decode.1} parent=11 // pred_region
        _
      $region76: #{_fused_decode.1} parent=11 // pred_fallthru
        _
      // Predicated region
      $region77: #{_fused_decode.1} parent=11 // pred_check
        %p476 = pneg %p387
      $region78: #{_fused_decode.1} parent=11 // pred_check_branch
        %478 = sbr.rel (%p476) target = $region80
      $region79: #{_fused_decode.1} parent=11 // pred_region
        _
      $region80: #{_fused_decode.1} parent=11 // pred_fallthru
        _
    $region12: #{_fused_decode.1} parent=5 // pred_fallthru
      _
    %p479 = scmp.lt.s32.totalorder %s30, 4
    // Predicated region
    $region81: #{_fused_decode.1} parent=5 // pred_check
      %p480 = pneg %p479
    $region82: #{_fused_decode.1} parent=5 // pred_check_branch
      %482 = sbr.rel (%p480) target = $region84
    $region83: #{_fused_decode.1} parent=5 // pred_region
      _
    $region84: #{_fused_decode.1} parent=5 // pred_fallthru
      _
    %p483 = scmp.le.s32.totalorder 1, %s30
    %p484 = scmp.lt.s32.totalorder %s30, 5
    %p485 = pnand %p483, %p484
    %p486 = pneg %p485
    // Predicated region
    $region85: #{_fused_decode.1} parent=5 // pred_check
      _
    $region86: #{_fused_decode.1} parent=5 // pred_check_branch
      %488 = sbr.rel (%p485) target = $region88
    $region87: #{_fused_decode.1} parent=5 // pred_region
      %s489 = ssub.s32 %s30, 1
      %p490 = pneg %p51
      %p491 = pneg %p48
      %p492 = pneg %p72
      %p493 = pneg %p69
      %p494 = pneg %p93
      %p495 = pneg %p90
      %p496 = pneg %p114
      %p497 = pneg %p111
      %p498 = pneg %p135
      %p499 = pneg %p132
      %p500 = pneg %p156
      %p501 = pneg %p153
      %p502 = pneg %p177
      %p503 = pneg %p174
      %p504 = pneg %p198
      %p505 = pneg %p195
      %p506 = pneg %p219
      %p507 = pneg %p216
      %p508 = pneg %p240
      %p509 = pneg %p237
      %p510 = pneg %p261
      %p511 = pneg %p258
      %p512 = pneg %p282
      %p513 = pneg %p279
      %p514 = pneg %p303
      %p515 = pneg %p300
      %p516 = pneg %p324
      %p517 = pneg %p321
      %p518 = pneg %p345
      %p519 = pneg %p342
      %p520 = pneg %p366
      %p521 = pneg %p363
      %p522 = pneg %p387
      %p523 = pneg %p384
      %p524 = pneg %p413
      %p525 = pneg %p410
      %p526 = scmp.lt.s32.totalorder %s35, 3
      %s527 = scalar_select %p526, %s35, 3
      %s528 = scalar_lea.vmem %s18, %s527
      %p529 = scmp.lt.s32.totalorder %s35, 3
      %s530 = scalar_select %p529, %s35, 3
      %s531 = scalar_lea.vmem %s18, %s530
      %p532 = scmp.eq.s32.totalorder %s35, 0
      // Predicated region
      $region89: #{_fused_decode.1} parent=87 // pred_check
        %p533 = pneg %p532
      $region90: #{_fused_decode.1} parent=87 // pred_check_branch
        %535 = sbr.rel (%p533) target = $region92
      $region91: #{_fused_decode.1} parent=87 // pred_region
        %v536 = vld [vmem:[%s14] sm:$0x1]
        %vm537 = vcmask 253952
        %538 = vst.msk [vmem:[#allocation2] sm:$0x1] %vm537, %v536
        %v539 = vld [vmem:[%s15] sm:$0x1]
        %540 = vst.msk [vmem:[#allocation3] sm:$0x1] %vm537, %v539
      $region92: #{_fused_decode.1} parent=87 // pred_fallthru
        _
      %v541 = vld [vmem:[#allocation2] sm:$0x1]
      %v542 = vld [vmem:[#allocation3] sm:$0x1]
      %v543 = vlaneseq
      %v544 = vand.u32 %v543, 127
      %s545 = smul.u32 %s35, 128
      %s546 = sld [smem:[#allocation5 + %s545]]
      %v547 = vstv %s546
      %vm548 = vcmp.eq.s32.totalorder %v544, %v547
      %v549 = vsel %vm548, 1, 0
      %v550 = vcvt.s32.f32 %v549
      %v551 = vld [vmem:[%s1] sm:$0xff]
      %v552 = vld [vmem:[%s1 + $0x8] sm:$0x3]
      %vm553 = vcmask 80896
      %v555 = vsel %vm553, %v550, 0
      %vm557 = vcmask 1041408
      %v559 = vsel %vm557, %v552, 0
      %561 = vmatprep.subr.mxu0 0.0
      %562 = vmatpush1.msra.mxu0 0.0
      %563 = vmatprep.subr.mxu0 0.0
      %564 = vmatpush1.msra.mxu0 0.0
      %565 = vmatprep.subr.mxu0 0.0
      %566 = vmatpush1.msra.mxu0 0.0
      %567 = vmatprep.subr.mxu0 0.0
      %568 = vmatpush1.msra.mxu0 0.0
      %569 = vmatprep.subr.mxu0 0.0
      %570 = vmatpush1.msra.mxu0 0.0
      %571 = vmatprep.subr.mxu0 0.0
      %572 = vmatpush1.msra.mxu0 0.0
      %573 = vmatprep.subr.mxu0 0.0
      %574 = vmatpush1.msra.mxu0 0.0
      %575 = vmatprep.subr.mxu0 0.0
      %576 = vmatpush1.msra.mxu0 0.0
      %577 = vmatprep.subr.mxu0 0.0
      %578 = vmatpush1.msra.mxu0 0.0
      %579 = vmatprep.subr.mxu0 0.0
      %580 = vmatpush1.msra.mxu0 0.0
      %581 = vmatprep.subr.mxu0 0.0
      %582 = vmatpush1.msra.mxu0 0.0
      %583 = vmatprep.subr.mxu0 0.0
      %584 = vmatpush1.msra.mxu0 0.0
      %585 = vmatprep.subr.mxu0 0.0
      %586 = vmatpush1.msra.mxu0 0.0
      %587 = vmatprep.subr.mxu0 0.0
      %588 = vmatpush1.msra.mxu0 0.0
      %589 = vmatprep.subr.mxu0 0.0
      %590 = vmatpush1.msra.mxu0 %v559
      %591 = vmatprep.subr.mxu0 0.0
      %592 = vmatpush1.msra.mxu0 %v551
      %593 = vmatprep.subr.mxu0 0.0
      %594 = vmatpush2.msra.mxu0 0.0
      %595 = vmatprep.subr.mxu0 0.0
      %596 = vmatpush2.msra.mxu0 0.0
      %597 = vmatprep.subr.mxu0 0.0
      %598 = vmatpush2.msra.mxu0 0.0
      %599 = vmatprep.subr.mxu0 0.0
      %600 = vmatpush2.msra.mxu0 0.0
      %601 = vmatprep.subr.mxu0 0.0
      %602 = vmatpush2.msra.mxu0 0.0
      %603 = vmatprep.subr.mxu0 0.0
      %604 = vmatpush2.msra.mxu0 0.0
      %605 = vmatprep.subr.mxu0 0.0
      %606 = vmatpush2.msra.mxu0 0.0
      %607 = vmatprep.subr.mxu0 0.0
      %608 = vmatpush2.msra.mxu0 0.0
      %609 = vmatprep.subr.mxu0 0.0
      %610 = vmatpush2.msra.mxu0 0.0
      %611 = vmatprep.subr.mxu0 0.0
      %612 = vmatpush2.msra.mxu0 0.0
      %613 = vmatprep.subr.mxu0 0.0
      %614 = vmatpush2.msra.mxu0 0.0
      %615 = vmatprep.subr.mxu0 0.0
      %616 = vmatpush2.msra.mxu0 0.0
      %617 = vmatprep.subr.mxu0 0.0
      %618 = vmatpush2.msra.mxu0 0.0
      %619 = vmatprep.subr.mxu0 0.0
      %620 = vmatpush2.msra.mxu0 0.0
      %621 = vmatprep.subr.mxu0 0.0
      %622 = vmatpush2.msra.mxu0 0.0
      %623 = vmatprep.subr.mxu0 0.0
      %624 = vmatpush2.msra.mxu0 0.0
      %625 = vmatprep.mubr.f32.mxu0 0.0
      %626 = vmatmul.mubr.f32.gmra.mxu0 %v555
      %v627 = vpop.f32.mrf.mxu0
      %v628 = vadd.f32 0.0, %v627
      %v629 = vpop.f32.mrf.mxu0
      %630 = vdwg.mxu0
      %s631 = sadd.s32 %s545, 1
      %s632 = sld [smem:[#allocation5 + %s631]]
      %v633 = vstv %s632
      %vm634 = vcmp.eq.s32.totalorder %v544, %v633
      %v635 = vsel %vm634, 1, 0
      %v636 = vcvt.s32.f32 %v635
      %v638 = vsel %vm553, %v636, 0
      %640 = vmatprep.subr.mxu0 0.0
      %641 = vmatpush1.msra.mxu0 0.0
      %642 = vmatprep.subr.mxu0 0.0
      %643 = vmatpush1.msra.mxu0 0.0
      %644 = vmatprep.subr.mxu0 0.0
      %645 = vmatpush1.msra.mxu0 0.0
      %646 = vmatprep.subr.mxu0 0.0
      %647 = vmatpush1.msra.mxu0 0.0
      %648 = vmatprep.subr.mxu0 0.0
      %649 = vmatpush1.msra.mxu0 0.0
      %650 = vmatprep.subr.mxu0 0.0
      %651 = vmatpush1.msra.mxu0 0.0
      %652 = vmatprep.subr.mxu0 0.0
      %653 = vmatpush1.msra.mxu0 0.0
      %654 = vmatprep.subr.mxu0 0.0
      %655 = vmatpush1.msra.mxu0 0.0
      %656 = vmatprep.subr.mxu0 0.0
      %657 = vmatpush1.msra.mxu0 0.0
      %658 = vmatprep.subr.mxu0 0.0
      %659 = vmatpush1.msra.mxu0 0.0
      %660 = vmatprep.subr.mxu0 0.0
      %661 = vmatpush1.msra.mxu0 0.0
      %662 = vmatprep.subr.mxu0 0.0
      %663 = vmatpush1.msra.mxu0 0.0
      %664 = vmatprep.subr.mxu0 0.0
      %665 = vmatpush1.msra.mxu0 0.0
      %666 = vmatprep.subr.mxu0 0.0
      %667 = vmatpush1.msra.mxu0 0.0
      %668 = vmatprep.subr.mxu0 0.0
      %669 = vmatpush1.msra.mxu0 %v559
      %670 = vmatprep.subr.mxu0 0.0
      %671 = vmatpush1.msra.mxu0 %v551
      %672 = vmatprep.subr.mxu0 0.0
      %673 = vmatpush2.msra.mxu0 0.0
      %674 = vmatprep.subr.mxu0 0.0
      %675 = vmatpush2.msra.mxu0 0.0
      %676 = vmatprep.subr.mxu0 0.0
      %677 = vmatpush2.msra.mxu0 0.0
      %678 = vmatprep.subr.mxu0 0.0
      %679 = vmatpush2.msra.mxu0 0.0
      %680 = vmatprep.subr.mxu0 0.0
      %681 = vmatpush2.msra.mxu0 0.0
      %682 = vmatprep.subr.mxu0 0.0
      %683 = vmatpush2.msra.mxu0 0.0
      %684 = vmatprep.subr.mxu0 0.0
      %685 = vmatpush2.msra.mxu0 0.0
      %686 = vmatprep.subr.mxu0 0.0
      %687 = vmatpush2.msra.mxu0 0.0
      %688 = vmatprep.subr.mxu0 0.0
      %689 = vmatpush2.msra.mxu0 0.0
      %690 = vmatprep.subr.mxu0 0.0
      %691 = vmatpush2.msra.mxu0 0.0
      %692 = vmatprep.subr.mxu0 0.0
      %693 = vmatpush2.msra.mxu0 0.0
      %694 = vmatprep.subr.mxu0 0.0
      %695 = vmatpush2.msra.mxu0 0.0
      %696 = vmatprep.subr.mxu0 0.0
      %697 = vmatpush2.msra.mxu0 0.0
      %698 = vmatprep.subr.mxu0 0.0
      %699 = vmatpush2.msra.mxu0 0.0
      %700 = vmatprep.subr.mxu0 0.0
      %701 = vmatpush2.msra.mxu0 0.0
      %702 = vmatprep.subr.mxu0 0.0
      %703 = vmatpush2.msra.mxu0 0.0
      %704 = vmatprep.mubr.f32.mxu0 0.0
      %705 = vmatmul.mubr.f32.gmra.mxu0 %v638
      %v706 = vpop.f32.mrf.mxu0
      %v707 = vadd.f32 0.0, %v706
      %v708 = vpop.f32.mrf.mxu0
      %709 = vdwg.mxu0
      %v710 = vmul.f32 %v707, 0.3
      %s711 = sadd.s32 %s545, 2
      %s712 = sld [smem:[#allocation5 + %s711]]
      %v713 = vstv %s712
      %vm714 = vcmp.eq.s32.totalorder %v544, %v713
      %v715 = vsel %vm714, 1, 0
      %v716 = vcvt.s32.f32 %v715
      %v718 = vsel %vm553, %v716, 0
      %720 = vmatprep.subr.mxu0 0.0
      %721 = vmatpush1.msra.mxu0 0.0
      %722 = vmatprep.subr.mxu0 0.0
      %723 = vmatpush1.msra.mxu0 0.0
      %724 = vmatprep.subr.mxu0 0.0
      %725 = vmatpush1.msra.mxu0 0.0
      %726 = vmatprep.subr.mxu0 0.0
      %727 = vmatpush1.msra.mxu0 0.0
      %728 = vmatprep.subr.mxu0 0.0
      %729 = vmatpush1.msra.mxu0 0.0
      %730 = vmatprep.subr.mxu0 0.0
      %731 = vmatpush1.msra.mxu0 0.0
      %732 = vmatprep.subr.mxu0 0.0
      %733 = vmatpush1.msra.mxu0 0.0
      %734 = vmatprep.subr.mxu0 0.0
      %735 = vmatpush1.msra.mxu0 0.0
      %736 = vmatprep.subr.mxu0 0.0
      %737 = vmatpush1.msra.mxu0 0.0
      %738 = vmatprep.subr.mxu0 0.0
      %739 = vmatpush1.msra.mxu0 0.0
      %740 = vmatprep.subr.mxu0 0.0
      %741 = vmatpush1.msra.mxu0 0.0
      %742 = vmatprep.subr.mxu0 0.0
      %743 = vmatpush1.msra.mxu0 0.0
      %744 = vmatprep.subr.mxu0 0.0
      %745 = vmatpush1.msra.mxu0 0.0
      %746 = vmatprep.subr.mxu0 0.0
      %747 = vmatpush1.msra.mxu0 0.0
      %748 = vmatprep.subr.mxu0 0.0
      %749 = vmatpush1.msra.mxu0 %v559
      %750 = vmatprep.subr.mxu0 0.0
      %751 = vmatpush1.msra.mxu0 %v551
      %752 = vmatprep.subr.mxu0 0.0
      %753 = vmatpush2.msra.mxu0 0.0
      %754 = vmatprep.subr.mxu0 0.0
      %755 = vmatpush2.msra.mxu0 0.0
      %756 = vmatprep.subr.mxu0 0.0
      %757 = vmatpush2.msra.mxu0 0.0
      %758 = vmatprep.subr.mxu0 0.0
      %759 = vmatpush2.msra.mxu0 0.0
      %760 = vmatprep.subr.mxu0 0.0
      %761 = vmatpush2.msra.mxu0 0.0
      %762 = vmatprep.subr.mxu0 0.0
      %763 = vmatpush2.msra.mxu0 0.0
      %764 = vmatprep.subr.mxu0 0.0
      %765 = vmatpush2.msra.mxu0 0.0
      %766 = vmatprep.subr.mxu0 0.0
      %767 = vmatpush2.msra.mxu0 0.0
      %768 = vmatprep.subr.mxu0 0.0
      %769 = vmatpush2.msra.mxu0 0.0
      %770 = vmatprep.subr.mxu0 0.0
      %771 = vmatpush2.msra.mxu0 0.0
      %772 = vmatprep.subr.mxu0 0.0
      %773 = vmatpush2.msra.mxu0 0.0
      %774 = vmatprep.subr.mxu0 0.0
      %775 = vmatpush2.msra.mxu0 0.0
      %776 = vmatprep.subr.mxu0 0.0
      %777 = vmatpush2.msra.mxu0 0.0
      %778 = vmatprep.subr.mxu0 0.0
      %779 = vmatpush2.msra.mxu0 0.0
      %780 = vmatprep.subr.mxu0 0.0
      %781 = vmatpush2.msra.mxu0 0.0
      %782 = vmatprep.subr.mxu0 0.0
      %783 = vmatpush2.msra.mxu0 0.0
      %784 = vmatprep.mubr.f32.mxu0 0.0
      %785 = vmatmul.mubr.f32.gmra.mxu0 %v718
      %v786 = vpop.f32.mrf.mxu0
      %v787 = vadd.f32 0.0, %v786
      %v788 = vpop.f32.mrf.mxu0
      %789 = vdwg.mxu0
      %v790 = vmul.f32 %v787, 0.7
      %v791 = vld [vmem:[%s2] sm:$0xff]
      %v792 = vld [vmem:[%s2 + $0x8] sm:$0xff]
      %v793 = vld [vmem:[%s2 + $0x10] sm:$0xff]
      %v794 = vld [vmem:[%s2 + $0x18] sm:$0xff]
      %v795 = vld [vmem:[%s2 + $0x20] sm:$0xff]
      %v796 = vld [vmem:[%s2 + $0x28] sm:$0xff]
      %v797 = vld [vmem:[%s2 + $0x30] sm:$0xff]
      %v798 = vld [vmem:[%s2 + $0x38] sm:$0xff]
      %vm799 = vcmask 261120
      %v801 = vsel %vm799, %v710, 0
      %803 = vmatprep.subr.mxu0 0.0
      %804 = vmatpush1.msra.mxu0 0.0
      %805 = vmatprep.subr.mxu0 0.0
      %806 = vmatpush1.msra.mxu0 0.0
      %807 = vmatprep.subr.mxu0 0.0
      %808 = vmatpush1.msra.mxu0 0.0
      %809 = vmatprep.subr.mxu0 0.0
      %810 = vmatpush1.msra.mxu0 0.0
      %811 = vmatprep.subr.mxu0 0.0
      %812 = vmatpush1.msra.mxu0 0.0
      %813 = vmatprep.subr.mxu0 0.0
      %814 = vmatpush1.msra.mxu0 0.0
      %815 = vmatprep.subr.mxu0 0.0
      %816 = vmatpush1.msra.mxu0 0.0
      %817 = vmatprep.subr.mxu0 0.0
      %818 = vmatpush1.msra.mxu0 0.0
      %819 = vmatprep.subr.mxu0 0.0
      %820 = vmatpush1.msra.mxu0 0.0
      %821 = vmatprep.subr.mxu0 0.0
      %822 = vmatpush1.msra.mxu0 0.0
      %823 = vmatprep.subr.mxu0 0.0
      %824 = vmatpush1.msra.mxu0 0.0
      %825 = vmatprep.subr.mxu0 0.0
      %826 = vmatpush1.msra.mxu0 0.0
      %827 = vmatprep.subr.mxu0 0.0
      %828 = vmatpush1.msra.mxu0 %v798
      %829 = vmatprep.subr.mxu0 0.0
      %830 = vmatpush1.msra.mxu0 %v797
      %831 = vmatprep.subr.mxu0 0.0
      %832 = vmatpush1.msra.mxu0 %v796
      %833 = vmatprep.subr.mxu0 0.0
      %834 = vmatpush1.msra.mxu0 %v795
      %835 = vmatprep.subr.mxu0 0.0
      %836 = vmatpush2.msra.mxu0 0.0
      %837 = vmatprep.subr.mxu0 0.0
      %838 = vmatpush2.msra.mxu0 0.0
      %839 = vmatprep.subr.mxu0 0.0
      %840 = vmatpush2.msra.mxu0 0.0
      %841 = vmatprep.subr.mxu0 0.0
      %842 = vmatpush2.msra.mxu0 0.0
      %843 = vmatprep.subr.mxu0 0.0
      %844 = vmatpush2.msra.mxu0 0.0
      %845 = vmatprep.subr.mxu0 0.0
      %846 = vmatpush2.msra.mxu0 0.0
      %847 = vmatprep.subr.mxu0 0.0
      %848 = vmatpush2.msra.mxu0 0.0
      %849 = vmatprep.subr.mxu0 0.0
      %850 = vmatpush2.msra.mxu0 0.0
      %851 = vmatprep.subr.mxu0 0.0
      %852 = vmatpush2.msra.mxu0 0.0
      %853 = vmatprep.subr.mxu0 0.0
      %854 = vmatpush2.msra.mxu0 0.0
      %855 = vmatprep.subr.mxu0 0.0
      %856 = vmatpush2.msra.mxu0 0.0
      %857 = vmatprep.subr.mxu0 0.0
      %858 = vmatpush2.msra.mxu0 0.0
      %859 = vmatprep.subr.mxu0 0.0
      %860 = vmatpush2.msra.mxu0 0.0
      %861 = vmatprep.subr.mxu0 0.0
      %862 = vmatpush2.msra.mxu0 0.0
      %863 = vmatprep.subr.mxu0 0.0
      %864 = vmatpush2.msra.mxu0 0.0
      %865 = vmatprep.subr.mxu0 0.0
      %866 = vmatpush2.msra.mxu0 0.0
      %867 = vmatprep.mubr.f32.mxu0 0.0
      %868 = vmatmul.mubr.f32.gmra.mxu0 %v801
      %v869 = vpop.f32.mrf.mxu0
      %v870 = vadd.f32 0.0, %v869
      %v871 = vpop.f32.mrf.mxu0
      %872 = vdwg.mxu0
      %v874 = vsel %vm799, %v628, 0
      %876 = vmatprep.subr.mxu0 0.0
      %877 = vmatpush1.msra.mxu0 0.0
      %878 = vmatprep.subr.mxu0 0.0
      %879 = vmatpush1.msra.mxu0 0.0
      %880 = vmatprep.subr.mxu0 0.0
      %881 = vmatpush1.msra.mxu0 0.0
      %882 = vmatprep.subr.mxu0 0.0
      %883 = vmatpush1.msra.mxu0 0.0
      %884 = vmatprep.subr.mxu0 0.0
      %885 = vmatpush1.msra.mxu0 0.0
      %886 = vmatprep.subr.mxu0 0.0
      %887 = vmatpush1.msra.mxu0 0.0
      %888 = vmatprep.subr.mxu0 0.0
      %889 = vmatpush1.msra.mxu0 0.0
      %890 = vmatprep.subr.mxu0 0.0
      %891 = vmatpush1.msra.mxu0 0.0
      %892 = vmatprep.subr.mxu0 0.0
      %893 = vmatpush1.msra.mxu0 0.0
      %894 = vmatprep.subr.mxu0 0.0
      %895 = vmatpush1.msra.mxu0 0.0
      %896 = vmatprep.subr.mxu0 0.0
      %897 = vmatpush1.msra.mxu0 0.0
      %898 = vmatprep.subr.mxu0 0.0
      %899 = vmatpush1.msra.mxu0 0.0
      %900 = vmatprep.subr.mxu0 0.0
      %901 = vmatpush1.msra.mxu0 %v794
      %902 = vmatprep.subr.mxu0 0.0
      %903 = vmatpush1.msra.mxu0 %v793
      %904 = vmatprep.subr.mxu0 0.0
      %905 = vmatpush1.msra.mxu0 %v792
      %906 = vmatprep.subr.mxu0 0.0
      %907 = vmatpush1.msra.mxu0 %v791
      %908 = vmatprep.subr.mxu0 0.0
      %909 = vmatpush2.msra.mxu0 0.0
      %910 = vmatprep.subr.mxu0 0.0
      %911 = vmatpush2.msra.mxu0 0.0
      %912 = vmatprep.subr.mxu0 0.0
      %913 = vmatpush2.msra.mxu0 0.0
      %914 = vmatprep.subr.mxu0 0.0
      %915 = vmatpush2.msra.mxu0 0.0
      %916 = vmatprep.subr.mxu0 0.0
      %917 = vmatpush2.msra.mxu0 0.0
      %918 = vmatprep.subr.mxu0 0.0
      %919 = vmatpush2.msra.mxu0 0.0
      %920 = vmatprep.subr.mxu0 0.0
      %921 = vmatpush2.msra.mxu0 0.0
      %922 = vmatprep.subr.mxu0 0.0
      %923 = vmatpush2.msra.mxu0 0.0
      %924 = vmatprep.subr.mxu0 0.0
      %925 = vmatpush2.msra.mxu0 0.0
      %926 = vmatprep.subr.mxu0 0.0
      %927 = vmatpush2.msra.mxu0 0.0
      %928 = vmatprep.subr.mxu0 0.0
      %929 = vmatpush2.msra.mxu0 0.0
      %930 = vmatprep.subr.mxu0 0.0
      %931 = vmatpush2.msra.mxu0 0.0
      %932 = vmatprep.subr.mxu0 0.0
      %933 = vmatpush2.msra.mxu0 0.0
      %934 = vmatprep.subr.mxu0 0.0
      %935 = vmatpush2.msra.mxu0 0.0
      %936 = vmatprep.subr.mxu0 0.0
      %937 = vmatpush2.msra.mxu0 0.0
      %938 = vmatprep.subr.mxu0 0.0
      %939 = vmatpush2.msra.mxu0 0.0
      %940 = vmatprep.mubr.f32.mxu0 0.0
      %941 = vmatmul.mubr.f32.gmra.mxu0 %v874
      %v942 = vpop.f32.mrf.mxu0
      %v943 = vadd.f32 %v870, %v942
      %v944 = vpop.f32.mrf.mxu0
      %945 = vdwg.mxu0
      %v946 = vld [vmem:[%s2 + $0x40] sm:$0xff]
      %v947 = vld [vmem:[%s2 + $0x48] sm:$0xff]
      %v948 = vld [vmem:[%s2 + $0x50] sm:$0xff]
      %v949 = vld [vmem:[%s2 + $0x58] sm:$0xff]
      %v951 = vsel %vm799, %v790, 0
      %953 = vmatprep.subr.mxu0 0.0
      %954 = vmatpush1.msra.mxu0 0.0
      %955 = vmatprep.subr.mxu0 0.0
      %956 = vmatpush1.msra.mxu0 0.0
      %957 = vmatprep.subr.mxu0 0.0
      %958 = vmatpush1.msra.mxu0 0.0
      %959 = vmatprep.subr.mxu0 0.0
      %960 = vmatpush1.msra.mxu0 0.0
      %961 = vmatprep.subr.mxu0 0.0
      %962 = vmatpush1.msra.mxu0 0.0
      %963 = vmatprep.subr.mxu0 0.0
      %964 = vmatpush1.msra.mxu0 0.0
      %965 = vmatprep.subr.mxu0 0.0
      %966 = vmatpush1.msra.mxu0 0.0
      %967 = vmatprep.subr.mxu0 0.0
      %968 = vmatpush1.msra.mxu0 0.0
      %969 = vmatprep.subr.mxu0 0.0
      %970 = vmatpush1.msra.mxu0 0.0
      %971 = vmatprep.subr.mxu0 0.0
      %972 = vmatpush1.msra.mxu0 0.0
      %973 = vmatprep.subr.mxu0 0.0
      %974 = vmatpush1.msra.mxu0 0.0
      %975 = vmatprep.subr.mxu0 0.0
      %976 = vmatpush1.msra.mxu0 0.0
      %977 = vmatprep.subr.mxu0 0.0
      %978 = vmatpush1.msra.mxu0 %v949
      %979 = vmatprep.subr.mxu0 0.0
      %980 = vmatpush1.msra.mxu0 %v948
      %981 = vmatprep.subr.mxu0 0.0
      %982 = vmatpush1.msra.mxu0 %v947
      %983 = vmatprep.subr.mxu0 0.0
      %984 = vmatpush1.msra.mxu0 %v946
      %985 = vmatprep.subr.mxu0 0.0
      %986 = vmatpush2.msra.mxu0 0.0
      %987 = vmatprep.subr.mxu0 0.0
      %988 = vmatpush2.msra.mxu0 0.0
      %989 = vmatprep.subr.mxu0 0.0
      %990 = vmatpush2.msra.mxu0 0.0
      %991 = vmatprep.subr.mxu0 0.0
      %992 = vmatpush2.msra.mxu0 0.0
      %993 = vmatprep.subr.mxu0 0.0
      %994 = vmatpush2.msra.mxu0 0.0
      %995 = vmatprep.subr.mxu0 0.0
      %996 = vmatpush2.msra.mxu0 0.0
      %997 = vmatprep.subr.mxu0 0.0
      %998 = vmatpush2.msra.mxu0 0.0
      %999 = vmatprep.subr.mxu0 0.0
      %1000 = vmatpush2.msra.mxu0 0.0
      %1001 = vmatprep.subr.mxu0 0.0
      %1002 = vmatpush2.msra.mxu0 0.0
      %1003 = vmatprep.subr.mxu0 0.0
      %1004 = vmatpush2.msra.mxu0 0.0
      %1005 = vmatprep.subr.mxu0 0.0
      %1006 = vmatpush2.msra.mxu0 0.0
      %1007 = vmatprep.subr.mxu0 0.0
      %1008 = vmatpush2.msra.mxu0 0.0
      %1009 = vmatprep.subr.mxu0 0.0
      %1010 = vmatpush2.msra.mxu0 0.0
      %1011 = vmatprep.subr.mxu0 0.0
      %1012 = vmatpush2.msra.mxu0 0.0
      %1013 = vmatprep.subr.mxu0 0.0
      %1014 = vmatpush2.msra.mxu0 0.0
      %1015 = vmatprep.subr.mxu0 0.0
      %1016 = vmatpush2.msra.mxu0 0.0
      %1017 = vmatprep.mubr.f32.mxu0 0.0
      %1018 = vmatmul.mubr.f32.gmra.mxu0 %v951
      %v1019 = vpop.f32.mrf.mxu0
      %v1020 = vadd.f32 0.0, %v1019
      %v1021 = vpop.f32.mrf.mxu0
      %1022 = vdwg.mxu0
      %v1023 = vadd.f32 %v943, %v1020
      %v1024 = vld [vmem:[%s3] sm:$0x1]
      %v1025 = vadd.f32 %v1023, %v1024
      %v1026 = vld [vmem:[%s4] sm:$0xff]
      %v1027 = vld [vmem:[%s4 + $0x8] sm:$0xff]
      %v1028 = vld [vmem:[%s4 + $0x10] sm:$0xff]
      %v1029 = vld [vmem:[%s4 + $0x18] sm:$0xff]
      %v1030 = vld [vmem:[%s4 + $0x20] sm:$0xff]
      %v1031 = vld [vmem:[%s4 + $0x28] sm:$0xff]
      %v1032 = vld [vmem:[%s4 + $0x30] sm:$0xff]
      %v1033 = vld [vmem:[%s4 + $0x38] sm:$0xff]
      %v1035 = vsel %vm799, %v541, 0
      %1037 = vmatprep.subr.mxu0 0.0
      %1038 = vmatpush1.msra.mxu0 0.0
      %1039 = vmatprep.subr.mxu0 0.0
      %1040 = vmatpush1.msra.mxu0 0.0
      %1041 = vmatprep.subr.mxu0 0.0
      %1042 = vmatpush1.msra.mxu0 0.0
      %1043 = vmatprep.subr.mxu0 0.0
      %1044 = vmatpush1.msra.mxu0 0.0
      %1045 = vmatprep.subr.mxu0 0.0
      %1046 = vmatpush1.msra.mxu0 0.0
      %1047 = vmatprep.subr.mxu0 0.0
      %1048 = vmatpush1.msra.mxu0 0.0
      %1049 = vmatprep.subr.mxu0 0.0
      %1050 = vmatpush1.msra.mxu0 0.0
      %1051 = vmatprep.subr.mxu0 0.0
      %1052 = vmatpush1.msra.mxu0 0.0
      %1053 = vmatprep.subr.mxu0 0.0
      %1054 = vmatpush1.msra.mxu0 0.0
      %1055 = vmatprep.subr.mxu0 0.0
      %1056 = vmatpush1.msra.mxu0 0.0
      %1057 = vmatprep.subr.mxu0 0.0
      %1058 = vmatpush1.msra.mxu0 0.0
      %1059 = vmatprep.subr.mxu0 0.0
      %1060 = vmatpush1.msra.mxu0 0.0
      %1061 = vmatprep.subr.mxu0 0.0
      %1062 = vmatpush1.msra.mxu0 %v1033
      %1063 = vmatprep.subr.mxu0 0.0
      %1064 = vmatpush1.msra.mxu0 %v1032
      %1065 = vmatprep.subr.mxu0 0.0
      %1066 = vmatpush1.msra.mxu0 %v1031
      %1067 = vmatprep.subr.mxu0 0.0
      %1068 = vmatpush1.msra.mxu0 %v1030
      %1069 = vmatprep.subr.mxu0 0.0
      %1070 = vmatpush2.msra.mxu0 0.0
      %1071 = vmatprep.subr.mxu0 0.0
      %1072 = vmatpush2.msra.mxu0 0.0
      %1073 = vmatprep.subr.mxu0 0.0
      %1074 = vmatpush2.msra.mxu0 0.0
      %1075 = vmatprep.subr.mxu0 0.0
      %1076 = vmatpush2.msra.mxu0 0.0
      %1077 = vmatprep.subr.mxu0 0.0
      %1078 = vmatpush2.msra.mxu0 0.0
      %1079 = vmatprep.subr.mxu0 0.0
      %1080 = vmatpush2.msra.mxu0 0.0
      %1081 = vmatprep.subr.mxu0 0.0
      %1082 = vmatpush2.msra.mxu0 0.0
      %1083 = vmatprep.subr.mxu0 0.0
      %1084 = vmatpush2.msra.mxu0 0.0
      %1085 = vmatprep.subr.mxu0 0.0
      %1086 = vmatpush2.msra.mxu0 0.0
      %1087 = vmatprep.subr.mxu0 0.0
      %1088 = vmatpush2.msra.mxu0 0.0
      %1089 = vmatprep.subr.mxu0 0.0
      %1090 = vmatpush2.msra.mxu0 0.0
      %1091 = vmatprep.subr.mxu0 0.0
      %1092 = vmatpush2.msra.mxu0 0.0
      %1093 = vmatprep.subr.mxu0 0.0
      %1094 = vmatpush2.msra.mxu0 0.0
      %1095 = vmatprep.subr.mxu0 0.0
      %1096 = vmatpush2.msra.mxu0 0.0
      %1097 = vmatprep.subr.mxu0 0.0
      %1098 = vmatpush2.msra.mxu0 0.0
      %1099 = vmatprep.subr.mxu0 0.0
      %1100 = vmatpush2.msra.mxu0 0.0
      %1101 = vmatprep.mubr.f32.mxu0 0.0
      %1102 = vmatmul.mubr.f32.gmra.mxu0 %v1035
      %v1103 = vpop.f32.mrf.mxu0
      %v1104 = vadd.f32 0.0, %v1103
      %v1105 = vpop.f32.mrf.mxu0
      %1106 = vdwg.mxu0
      %v1108 = vsel %vm799, %v1025, 0
      %1110 = vmatprep.subr.mxu0 0.0
      %1111 = vmatpush1.msra.mxu0 0.0
      %1112 = vmatprep.subr.mxu0 0.0
      %1113 = vmatpush1.msra.mxu0 0.0
      %1114 = vmatprep.subr.mxu0 0.0
      %1115 = vmatpush1.msra.mxu0 0.0
      %1116 = vmatprep.subr.mxu0 0.0
      %1117 = vmatpush1.msra.mxu0 0.0
      %1118 = vmatprep.subr.mxu0 0.0
      %1119 = vmatpush1.msra.mxu0 0.0
      %1120 = vmatprep.subr.mxu0 0.0
      %1121 = vmatpush1.msra.mxu0 0.0
      %1122 = vmatprep.subr.mxu0 0.0
      %1123 = vmatpush1.msra.mxu0 0.0
      %1124 = vmatprep.subr.mxu0 0.0
      %1125 = vmatpush1.msra.mxu0 0.0
      %1126 = vmatprep.subr.mxu0 0.0
      %1127 = vmatpush1.msra.mxu0 0.0
      %1128 = vmatprep.subr.mxu0 0.0
      %1129 = vmatpush1.msra.mxu0 0.0
      %1130 = vmatprep.subr.mxu0 0.0
      %1131 = vmatpush1.msra.mxu0 0.0
      %1132 = vmatprep.subr.mxu0 0.0
      %1133 = vmatpush1.msra.mxu0 0.0
      %1134 = vmatprep.subr.mxu0 0.0
      %1135 = vmatpush1.msra.mxu0 %v1029
      %1136 = vmatprep.subr.mxu0 0.0
      %1137 = vmatpush1.msra.mxu0 %v1028
      %1138 = vmatprep.subr.mxu0 0.0
      %1139 = vmatpush1.msra.mxu0 %v1027
      %1140 = vmatprep.subr.mxu0 0.0
      %1141 = vmatpush1.msra.mxu0 %v1026
      %1142 = vmatprep.subr.mxu0 0.0
      %1143 = vmatpush2.msra.mxu0 0.0
      %1144 = vmatprep.subr.mxu0 0.0
      %1145 = vmatpush2.msra.mxu0 0.0
      %1146 = vmatprep.subr.mxu0 0.0
      %1147 = vmatpush2.msra.mxu0 0.0
      %1148 = vmatprep.subr.mxu0 0.0
      %1149 = vmatpush2.msra.mxu0 0.0
      %1150 = vmatprep.subr.mxu0 0.0
      %1151 = vmatpush2.msra.mxu0 0.0
      %1152 = vmatprep.subr.mxu0 0.0
      %1153 = vmatpush2.msra.mxu0 0.0
      %1154 = vmatprep.subr.mxu0 0.0
      %1155 = vmatpush2.msra.mxu0 0.0
      %1156 = vmatprep.subr.mxu0 0.0
      %1157 = vmatpush2.msra.mxu0 0.0
      %1158 = vmatprep.subr.mxu0 0.0
      %1159 = vmatpush2.msra.mxu0 0.0
      %1160 = vmatprep.subr.mxu0 0.0
      %1161 = vmatpush2.msra.mxu0 0.0
      %1162 = vmatprep.subr.mxu0 0.0
      %1163 = vmatpush2.msra.mxu0 0.0
      %1164 = vmatprep.subr.mxu0 0.0
      %1165 = vmatpush2.msra.mxu0 0.0
      %1166 = vmatprep.subr.mxu0 0.0
      %1167 = vmatpush2.msra.mxu0 0.0
      %1168 = vmatprep.subr.mxu0 0.0
      %1169 = vmatpush2.msra.mxu0 0.0
      %1170 = vmatprep.subr.mxu0 0.0
      %1171 = vmatpush2.msra.mxu0 0.0
      %1172 = vmatprep.subr.mxu0 0.0
      %1173 = vmatpush2.msra.mxu0 0.0
      %1174 = vmatprep.mubr.f32.mxu0 0.0
      %1175 = vmatmul.mubr.f32.gmra.mxu0 %v1108
      %v1176 = vpop.f32.mrf.mxu0
      %v1177 = vadd.f32 %v1104, %v1176
      %v1178 = vpop.f32.mrf.mxu0
      %1179 = vdwg.mxu0
      %v1180 = vld [vmem:[%s5] sm:$0x1]
      %v1181 = vadd.f32 %v1177, %v1180
      %v1182 = vld [vmem:[%s6] sm:$0xff]
      %v1183 = vld [vmem:[%s6 + $0x8] sm:$0xff]
      %v1184 = vld [vmem:[%s6 + $0x10] sm:$0xff]
      %v1185 = vld [vmem:[%s6 + $0x18] sm:$0xff]
      %v1186 = vld [vmem:[%s7] sm:$0x1]
      %v1188 = vsel %vm799, %v1181, 0
      %1190 = vmatprep.subr.mxu0 0.0
      %1191 = vmatpush1.msra.mxu0 0.0
      %1192 = vmatprep.subr.mxu0 0.0
      %1193 = vmatpush1.msra.mxu0 0.0
      %1194 = vmatprep.subr.mxu0 0.0
      %1195 = vmatpush1.msra.mxu0 0.0
      %1196 = vmatprep.subr.mxu0 0.0
      %1197 = vmatpush1.msra.mxu0 0.0
      %1198 = vmatprep.subr.mxu0 0.0
      %1199 = vmatpush1.msra.mxu0 0.0
      %1200 = vmatprep.subr.mxu0 0.0
      %1201 = vmatpush1.msra.mxu0 0.0
      %1202 = vmatprep.subr.mxu0 0.0
      %1203 = vmatpush1.msra.mxu0 0.0
      %1204 = vmatprep.subr.mxu0 0.0
      %1205 = vmatpush1.msra.mxu0 0.0
      %1206 = vmatprep.subr.mxu0 0.0
      %1207 = vmatpush1.msra.mxu0 0.0
      %1208 = vmatprep.subr.mxu0 0.0
      %1209 = vmatpush1.msra.mxu0 0.0
      %1210 = vmatprep.subr.mxu0 0.0
      %1211 = vmatpush1.msra.mxu0 0.0
      %1212 = vmatprep.subr.mxu0 0.0
      %1213 = vmatpush1.msra.mxu0 0.0
      %1214 = vmatprep.subr.mxu0 0.0
      %1215 = vmatpush1.msra.mxu0 %v1185
      %1216 = vmatprep.subr.mxu0 0.0
      %1217 = vmatpush1.msra.mxu0 %v1184
      %1218 = vmatprep.subr.mxu0 0.0
      %1219 = vmatpush1.msra.mxu0 %v1183
      %1220 = vmatprep.subr.mxu0 0.0
      %1221 = vmatpush1.msra.mxu0 %v1182
      %1222 = vmatprep.subr.mxu0 0.0
      %1223 = vmatpush2.msra.mxu0 0.0
      %1224 = vmatprep.subr.mxu0 0.0
      %1225 = vmatpush2.msra.mxu0 0.0
      %1226 = vmatprep.subr.mxu0 0.0
      %1227 = vmatpush2.msra.mxu0 0.0
      %1228 = vmatprep.subr.mxu0 0.0
      %1229 = vmatpush2.msra.mxu0 0.0
      %1230 = vmatprep.subr.mxu0 0.0
      %1231 = vmatpush2.msra.mxu0 0.0
      %1232 = vmatprep.subr.mxu0 0.0
      %1233 = vmatpush2.msra.mxu0 0.0
      %1234 = vmatprep.subr.mxu0 0.0
      %1235 = vmatpush2.msra.mxu0 0.0
      %1236 = vmatprep.subr.mxu0 0.0
      %1237 = vmatpush2.msra.mxu0 0.0
      %1238 = vmatprep.subr.mxu0 0.0
      %1239 = vmatpush2.msra.mxu0 0.0
      %1240 = vmatprep.subr.mxu0 0.0
      %1241 = vmatpush2.msra.mxu0 0.0
      %1242 = vmatprep.subr.mxu0 0.0
      %1243 = vmatpush2.msra.mxu0 0.0
      %1244 = vmatprep.subr.mxu0 0.0
      %1245 = vmatpush2.msra.mxu0 0.0
      %1246 = vmatprep.subr.mxu0 0.0
      %1247 = vmatpush2.msra.mxu0 0.0
      %1248 = vmatprep.subr.mxu0 0.0
      %1249 = vmatpush2.msra.mxu0 0.0
      %1250 = vmatprep.subr.mxu0 0.0
      %1251 = vmatpush2.msra.mxu0 0.0
      %1252 = vmatprep.subr.mxu0 0.0
      %1253 = vmatpush2.msra.mxu0 0.0
      %1254 = vmatprep.mubr.f32.mxu0 0.0
      %1255 = vmatmul.mubr.f32.gmra.mxu0 %v1188
      %v1256 = vpop.f32.mrf.mxu0
      %v1257 = vadd.f32 %v1186, %v1256
      %v1258 = vpop.f32.mrf.mxu0
      %1259 = vdwg.mxu0
      %v1260 = vld [vmem:[%s8] sm:$0xff]
      %vm1261 = vcmask 64512
      %v1263 = vsel %vm1261, %v1257, 0
      %1265 = vmatprep.subr.mxu0 0.0
      %1266 = vmatpush1.msra.mxu0 0.0
      %1267 = vmatprep.subr.mxu0 0.0
      %1268 = vmatpush1.msra.mxu0 0.0
      %1269 = vmatprep.subr.mxu0 0.0
      %1270 = vmatpush1.msra.mxu0 0.0
      %1271 = vmatprep.subr.mxu0 0.0
      %1272 = vmatpush1.msra.mxu0 0.0
      %1273 = vmatprep.subr.mxu0 0.0
      %1274 = vmatpush1.msra.mxu0 0.0
      %1275 = vmatprep.subr.mxu0 0.0
      %1276 = vmatpush1.msra.mxu0 0.0
      %1277 = vmatprep.subr.mxu0 0.0
      %1278 = vmatpush1.msra.mxu0 0.0
      %1279 = vmatprep.subr.mxu0 0.0
      %1280 = vmatpush1.msra.mxu0 0.0
      %1281 = vmatprep.subr.mxu0 0.0
      %1282 = vmatpush1.msra.mxu0 0.0
      %1283 = vmatprep.subr.mxu0 0.0
      %1284 = vmatpush1.msra.mxu0 0.0
      %1285 = vmatprep.subr.mxu0 0.0
      %1286 = vmatpush1.msra.mxu0 0.0
      %1287 = vmatprep.subr.mxu0 0.0
      %1288 = vmatpush1.msra.mxu0 0.0
      %1289 = vmatprep.subr.mxu0 0.0
      %1290 = vmatpush1.msra.mxu0 0.0
      %1291 = vmatprep.subr.mxu0 0.0
      %1292 = vmatpush1.msra.mxu0 0.0
      %1293 = vmatprep.subr.mxu0 0.0
      %1294 = vmatpush1.msra.mxu0 0.0
      %1295 = vmatprep.subr.mxu0 0.0
      %1296 = vmatpush1.msra.mxu0 %v1260
      %1297 = vmatprep.subr.mxu0 0.0
      %1298 = vmatpush2.msra.mxu0 0.0
      %1299 = vmatprep.subr.mxu0 0.0
      %1300 = vmatpush2.msra.mxu0 0.0
      %1301 = vmatprep.subr.mxu0 0.0
      %1302 = vmatpush2.msra.mxu0 0.0
      %1303 = vmatprep.subr.mxu0 0.0
      %1304 = vmatpush2.msra.mxu0 0.0
      %1305 = vmatprep.subr.mxu0 0.0
      %1306 = vmatpush2.msra.mxu0 0.0
      %1307 = vmatprep.subr.mxu0 0.0
      %1308 = vmatpush2.msra.mxu0 0.0
      %1309 = vmatprep.subr.mxu0 0.0
      %1310 = vmatpush2.msra.mxu0 0.0
      %1311 = vmatprep.subr.mxu0 0.0
      %1312 = vmatpush2.msra.mxu0 0.0
      %1313 = vmatprep.subr.mxu0 0.0
      %1314 = vmatpush2.msra.mxu0 0.0
      %1315 = vmatprep.subr.mxu0 0.0
      %1316 = vmatpush2.msra.mxu0 0.0
      %1317 = vmatprep.subr.mxu0 0.0
      %1318 = vmatpush2.msra.mxu0 0.0
      %1319 = vmatprep.subr.mxu0 0.0
      %1320 = vmatpush2.msra.mxu0 0.0
      %1321 = vmatprep.subr.mxu0 0.0
      %1322 = vmatpush2.msra.mxu0 0.0
      %1323 = vmatprep.subr.mxu0 0.0
      %1324 = vmatpush2.msra.mxu0 0.0
      %1325 = vmatprep.subr.mxu0 0.0
      %1326 = vmatpush2.msra.mxu0 0.0
      %1327 = vmatprep.subr.mxu0 0.0
      %1328 = vmatpush2.msra.mxu0 0.0
      %1329 = vmatprep.mubr.f32.mxu0 0.0
      %1330 = vmatmul.mubr.f32.gmra.mxu0 %v1263
      %v1331 = vpop.f32.mrf.mxu0
      %v1332 = vadd.f32 0.0, %v1331
      %v1333 = vpop.f32.mrf.mxu0
      %1334 = vdwg.mxu0
      %v1335 = vld [vmem:[%s9] sm:$0xff]
      %v1336 = vld [vmem:[%s9 + $0x8] sm:$0xff]
      %v1337 = vld [vmem:[%s9 + $0x10] sm:$0xff]
      %v1338 = vld [vmem:[%s9 + $0x18] sm:$0xff]
      %v1339 = vld [vmem:[%s9 + $0x20] sm:$0xff]
      %v1340 = vld [vmem:[%s9 + $0x28] sm:$0xff]
      %v1341 = vld [vmem:[%s9 + $0x30] sm:$0xff]
      %v1342 = vld [vmem:[%s9 + $0x38] sm:$0xff]
      %v1343 = vld [vmem:[%s10] sm:$0x1]
      %vm1344 = vcmask 523264
      %v1346 = vsel %vm1344, %v1332, 0
      %1348 = vmatprep.subr.mxu0 0.0
      %1349 = vmatpush1.msra.mxu0 0.0
      %1350 = vmatprep.subr.mxu0 0.0
      %1351 = vmatpush1.msra.mxu0 0.0
      %1352 = vmatprep.subr.mxu0 0.0
      %1353 = vmatpush1.msra.mxu0 0.0
      %1354 = vmatprep.subr.mxu0 0.0
      %1355 = vmatpush1.msra.mxu0 0.0
      %1356 = vmatprep.subr.mxu0 0.0
      %1357 = vmatpush1.msra.mxu0 0.0
      %1358 = vmatprep.subr.mxu0 0.0
      %1359 = vmatpush1.msra.mxu0 0.0
      %1360 = vmatprep.subr.mxu0 0.0
      %1361 = vmatpush1.msra.mxu0 0.0
      %1362 = vmatprep.subr.mxu0 0.0
      %1363 = vmatpush1.msra.mxu0 0.0
      %1364 = vmatprep.subr.mxu0 0.0
      %1365 = vmatpush1.msra.mxu0 %v1342
      %1366 = vmatprep.subr.mxu0 0.0
      %1367 = vmatpush1.msra.mxu0 %v1341
      %1368 = vmatprep.subr.mxu0 0.0
      %1369 = vmatpush1.msra.mxu0 %v1340
      %1370 = vmatprep.subr.mxu0 0.0
      %1371 = vmatpush1.msra.mxu0 %v1339
      %1372 = vmatprep.subr.mxu0 0.0
      %1373 = vmatpush1.msra.mxu0 %v1338
      %1374 = vmatprep.subr.mxu0 0.0
      %1375 = vmatpush1.msra.mxu0 %v1337
      %1376 = vmatprep.subr.mxu0 0.0
      %1377 = vmatpush1.msra.mxu0 %v1336
      %1378 = vmatprep.subr.mxu0 0.0
      %1379 = vmatpush1.msra.mxu0 %v1335
      %1380 = vmatprep.subr.mxu0 0.0
      %1381 = vmatpush2.msra.mxu0 0.0
      %1382 = vmatprep.subr.mxu0 0.0
      %1383 = vmatpush2.msra.mxu0 0.0
      %1384 = vmatprep.subr.mxu0 0.0
      %1385 = vmatpush2.msra.mxu0 0.0
      %1386 = vmatprep.subr.mxu0 0.0
      %1387 = vmatpush2.msra.mxu0 0.0
      %1388 = vmatprep.subr.mxu0 0.0
      %1389 = vmatpush2.msra.mxu0 0.0
      %1390 = vmatprep.subr.mxu0 0.0
      %1391 = vmatpush2.msra.mxu0 0.0
      %1392 = vmatprep.subr.mxu0 0.0
      %1393 = vmatpush2.msra.mxu0 0.0
      %1394 = vmatprep.subr.mxu0 0.0
      %1395 = vmatpush2.msra.mxu0 0.0
      %1396 = vmatprep.subr.mxu0 0.0
      %1397 = vmatpush2.msra.mxu0 0.0
      %1398 = vmatprep.subr.mxu0 0.0
      %1399 = vmatpush2.msra.mxu0 0.0
      %1400 = vmatprep.subr.mxu0 0.0
      %1401 = vmatpush2.msra.mxu0 0.0
      %1402 = vmatprep.subr.mxu0 0.0
      %1403 = vmatpush2.msra.mxu0 0.0
      %1404 = vmatprep.subr.mxu0 0.0
      %1405 = vmatpush2.msra.mxu0 0.0
      %1406 = vmatprep.subr.mxu0 0.0
      %1407 = vmatpush2.msra.mxu0 0.0
      %1408 = vmatprep.subr.mxu0 0.0
      %1409 = vmatpush2.msra.mxu0 0.0
      %1410 = vmatprep.subr.mxu0 0.0
      %1411 = vmatpush2.msra.mxu0 0.0
      %1412 = vmatprep.mubr.f32.mxu0 0.0
      %1413 = vmatmul.mubr.f32.gmra.mxu0 %v1346
      %v1414 = vpop.f32.mrf.mxu0
      %v1415 = vadd.f32 %v1343, %v1414
      %v1416 = vpop.f32.mrf.mxu0
      %1417 = vdwg.mxu0
      %v1418 = vld [vmem:[%s9] sm:$0xff]
      %v1419 = vld [vmem:[%s9 + $0x8] sm:$0xff]
      %v1420 = vld [vmem:[%s9 + $0x10] sm:$0xff]
      %v1421 = vld [vmem:[%s9 + $0x18] sm:$0xff]
      %v1423 = vsel %vm799, %v1415, 0
      %1425 = vmatprep.subr.mxu0 0.0
      %1426 = vmatpush1.msra.mxu0 0.0
      %1427 = vmatprep.subr.mxu0 0.0
      %1428 = vmatpush1.msra.mxu0 0.0
      %1429 = vmatprep.subr.mxu0 0.0
      %1430 = vmatpush1.msra.mxu0 0.0
      %1431 = vmatprep.subr.mxu0 0.0
      %1432 = vmatpush1.msra.mxu0 0.0
      %1433 = vmatprep.subr.mxu0 0.0
      %1434 = vmatpush1.msra.mxu0 0.0
      %1435 = vmatprep.subr.mxu0 0.0
      %1436 = vmatpush1.msra.mxu0 0.0
      %1437 = vmatprep.subr.mxu0 0.0
      %1438 = vmatpush1.msra.mxu0 0.0
      %1439 = vmatprep.subr.mxu0 0.0
      %1440 = vmatpush1.msra.mxu0 0.0
      %1441 = vmatprep.subr.mxu0 0.0
      %1442 = vmatpush1.msra.mxu0 0.0
      %1443 = vmatprep.subr.mxu0 0.0
      %1444 = vmatpush1.msra.mxu0 0.0
      %1445 = vmatprep.subr.mxu0 0.0
      %1446 = vmatpush1.msra.mxu0 0.0
      %1447 = vmatprep.subr.mxu0 0.0
      %1448 = vmatpush1.msra.mxu0 0.0
      %1449 = vmatprep.subr.mxu0 0.0
      %1450 = vmatpush1.msra.mxu0 %v1342
      %1451 = vmatprep.subr.mxu0 0.0
      %1452 = vmatpush1.msra.mxu0 %v1341
      %1453 = vmatprep.subr.mxu0 0.0
      %1454 = vmatpush1.msra.mxu0 %v1340
      %1455 = vmatprep.subr.mxu0 0.0
      %1456 = vmatpush1.msra.mxu0 %v1339
      %1457 = vmatprep.subr.mxu0 0.0
      %1458 = vmatpush2.msra.mxu0 0.0
      %1459 = vmatprep.subr.mxu0 0.0
      %1460 = vmatpush2.msra.mxu0 0.0
      %1461 = vmatprep.subr.mxu0 0.0
      %1462 = vmatpush2.msra.mxu0 0.0
      %1463 = vmatprep.subr.mxu0 0.0
      %1464 = vmatpush2.msra.mxu0 0.0
      %1465 = vmatprep.subr.mxu0 0.0
      %1466 = vmatpush2.msra.mxu0 0.0
      %1467 = vmatprep.subr.mxu0 0.0
      %1468 = vmatpush2.msra.mxu0 0.0
      %1469 = vmatprep.subr.mxu0 0.0
      %1470 = vmatpush2.msra.mxu0 0.0
      %1471 = vmatprep.subr.mxu0 0.0
      %1472 = vmatpush2.msra.mxu0 0.0
      %1473 = vmatprep.subr.mxu0 0.0
      %1474 = vmatpush2.msra.mxu0 0.0
      %1475 = vmatprep.subr.mxu0 0.0
      %1476 = vmatpush2.msra.mxu0 0.0
      %1477 = vmatprep.subr.mxu0 0.0
      %1478 = vmatpush2.msra.mxu0 0.0
      %1479 = vmatprep.subr.mxu0 0.0
      %1480 = vmatpush2.msra.mxu0 0.0
      %1481 = vmatprep.subr.mxu0 0.0
      %1482 = vmatpush2.msra.mxu0 0.0
      %1483 = vmatprep.subr.mxu0 0.0
      %1484 = vmatpush2.msra.mxu0 0.0
      %1485 = vmatprep.subr.mxu0 0.0
      %1486 = vmatpush2.msra.mxu0 0.0
      %1487 = vmatprep.subr.mxu0 0.0
      %1488 = vmatpush2.msra.mxu0 0.0
      %1489 = vmatprep.mubr.f32.mxu0 0.0
      %1490 = vmatmul.mubr.f32.gmra.mxu0 %v1423
      %v1491 = vpop.f32.mrf.mxu0
      %v1492 = vadd.f32 0.0, %v1491
      %v1493 = vpop.f32.mrf.mxu0
      %1494 = vdwg.mxu0
      %1495 = vmatprep.subr.mxu0 0.0
      %1496 = vmatpush1.msra.mxu0 0.0
      %1497 = vmatprep.subr.mxu0 0.0
      %1498 = vmatpush1.msra.mxu0 0.0
      %1499 = vmatprep.subr.mxu0 0.0
      %1500 = vmatpush1.msra.mxu0 0.0
      %1501 = vmatprep.subr.mxu0 0.0
      %1502 = vmatpush1.msra.mxu0 0.0
      %1503 = vmatprep.subr.mxu0 0.0
      %1504 = vmatpush1.msra.mxu0 0.0
      %1505 = vmatprep.subr.mxu0 0.0
      %1506 = vmatpush1.msra.mxu0 0.0
      %1507 = vmatprep.subr.mxu0 0.0
      %1508 = vmatpush1.msra.mxu0 0.0
      %1509 = vmatprep.subr.mxu0 0.0
      %1510 = vmatpush1.msra.mxu0 0.0
      %1511 = vmatprep.subr.mxu0 0.0
      %1512 = vmatpush1.msra.mxu0 0.0
      %1513 = vmatprep.subr.mxu0 0.0
      %1514 = vmatpush1.msra.mxu0 0.0
      %1515 = vmatprep.subr.mxu0 0.0
      %1516 = vmatpush1.msra.mxu0 0.0
      %1517 = vmatprep.subr.mxu0 0.0
      %1518 = vmatpush1.msra.mxu0 0.0
      %1519 = vmatprep.subr.mxu0 0.0
      %1520 = vmatpush1.msra.mxu0 %v1421
      %1521 = vmatprep.subr.mxu0 0.0
      %1522 = vmatpush1.msra.mxu0 %v1420
      %1523 = vmatprep.subr.mxu0 0.0
      %1524 = vmatpush1.msra.mxu0 %v1419
      %1525 = vmatprep.subr.mxu0 0.0
      %1526 = vmatpush1.msra.mxu0 %v1418
      %1527 = vmatprep.subr.mxu0 0.0
      %1528 = vmatpush2.msra.mxu0 0.0
      %1529 = vmatprep.subr.mxu0 0.0
      %1530 = vmatpush2.msra.mxu0 0.0
      %1531 = vmatprep.subr.mxu0 0.0
      %1532 = vmatpush2.msra.mxu0 0.0
      %1533 = vmatprep.subr.mxu0 0.0
      %1534 = vmatpush2.msra.mxu0 0.0
      %1535 = vmatprep.subr.mxu0 0.0
      %1536 = vmatpush2.msra.mxu0 0.0
      %1537 = vmatprep.subr.mxu0 0.0
      %1538 = vmatpush2.msra.mxu0 0.0
      %1539 = vmatprep.subr.mxu0 0.0
      %1540 = vmatpush2.msra.mxu0 0.0
      %1541 = vmatprep.subr.mxu0 0.0
      %1542 = vmatpush2.msra.mxu0 0.0
      %1543 = vmatprep.subr.mxu0 0.0
      %1544 = vmatpush2.msra.mxu0 0.0
      %1545 = vmatprep.subr.mxu0 0.0
      %1546 = vmatpush2.msra.mxu0 0.0
      %1547 = vmatprep.subr.mxu0 0.0
      %1548 = vmatpush2.msra.mxu0 0.0
      %1549 = vmatprep.subr.mxu0 0.0
      %1550 = vmatpush2.msra.mxu0 0.0
      %1551 = vmatprep.subr.mxu0 0.0
      %1552 = vmatpush2.msra.mxu0 0.0
      %1553 = vmatprep.subr.mxu0 0.0
      %1554 = vmatpush2.msra.mxu0 0.0
      %1555 = vmatprep.subr.mxu0 0.0
      %1556 = vmatpush2.msra.mxu0 0.0
      %1557 = vmatprep.subr.mxu0 0.0
      %1558 = vmatpush2.msra.mxu0 0.0
      %1559 = vmatprep.mubr.f32.mxu0 0.0
      %1560 = vmatmul.mubr.f32.gmra.mxu0 %v1108
      %v1561 = vpop.f32.mrf.mxu0
      %v1562 = vadd.f32 %v1492, %v1561
      %v1563 = vpop.f32.mrf.mxu0
      %1564 = vdwg.mxu0
      %v1565 = vadd.f32 %v1562, %v1343
      %v1566 = vmax.f32 %v1565, 0.0
      %v1567 = vld [vmem:[%s11] sm:$0xff]
      %v1568 = vld [vmem:[%s11 + $0x8] sm:$0xff]
      %v1569 = vld [vmem:[%s11 + $0x10] sm:$0xff]
      %v1570 = vld [vmem:[%s11 + $0x18] sm:$0xff]
      %v1571 = vld [vmem:[%s12] sm:$0xff]
      %v1572 = vld [vmem:[%s12 + $0x8] sm:$0xff]
      %v1573 = vld [vmem:[%s12 + $0x10] sm:$0xff]
      %v1574 = vld [vmem:[%s12 + $0x18] sm:$0xff]
      %1575 = vmatprep.subr.mxu0 0.0
      %1576 = vmatpush1.msra.mxu0 0.0
      %1577 = vmatprep.subr.mxu0 0.0
      %1578 = vmatpush1.msra.mxu0 0.0
      %1579 = vmatprep.subr.mxu0 0.0
      %1580 = vmatpush1.msra.mxu0 0.0
      %1581 = vmatprep.subr.mxu0 0.0
      %1582 = vmatpush1.msra.mxu0 0.0
      %1583 = vmatprep.subr.mxu0 0.0
      %1584 = vmatpush1.msra.mxu0 0.0
      %1585 = vmatprep.subr.mxu0 0.0
      %1586 = vmatpush1.msra.mxu0 0.0
      %1587 = vmatprep.subr.mxu0 0.0
      %1588 = vmatpush1.msra.mxu0 0.0
      %1589 = vmatprep.subr.mxu0 0.0
      %1590 = vmatpush1.msra.mxu0 0.0
      %1591 = vmatprep.subr.mxu0 0.0
      %1592 = vmatpush1.msra.mxu0 0.0
      %1593 = vmatprep.subr.mxu0 0.0
      %1594 = vmatpush1.msra.mxu0 0.0
      %1595 = vmatprep.subr.mxu0 0.0
      %1596 = vmatpush1.msra.mxu0 0.0
      %1597 = vmatprep.subr.mxu0 0.0
      %1598 = vmatpush1.msra.mxu0 0.0
      %1599 = vmatprep.subr.mxu0 0.0
      %1600 = vmatpush1.msra.mxu0 %v1574
      %1601 = vmatprep.subr.mxu0 0.0
      %1602 = vmatpush1.msra.mxu0 %v1573
      %1603 = vmatprep.subr.mxu0 0.0
      %1604 = vmatpush1.msra.mxu0 %v1572
      %1605 = vmatprep.subr.mxu0 0.0
      %1606 = vmatpush1.msra.mxu0 %v1571
      %1607 = vmatprep.subr.mxu0 0.0
      %1608 = vmatpush2.msra.mxu0 0.0
      %1609 = vmatprep.subr.mxu0 0.0
      %1610 = vmatpush2.msra.mxu0 0.0
      %1611 = vmatprep.subr.mxu0 0.0
      %1612 = vmatpush2.msra.mxu0 0.0
      %1613 = vmatprep.subr.mxu0 0.0
      %1614 = vmatpush2.msra.mxu0 0.0
      %1615 = vmatprep.subr.mxu0 0.0
      %1616 = vmatpush2.msra.mxu0 0.0
      %1617 = vmatprep.subr.mxu0 0.0
      %1618 = vmatpush2.msra.mxu0 0.0
      %1619 = vmatprep.subr.mxu0 0.0
      %1620 = vmatpush2.msra.mxu0 0.0
      %1621 = vmatprep.subr.mxu0 0.0
      %1622 = vmatpush2.msra.mxu0 0.0
      %1623 = vmatprep.subr.mxu0 0.0
      %1624 = vmatpush2.msra.mxu0 0.0
      %1625 = vmatprep.subr.mxu0 0.0
      %1626 = vmatpush2.msra.mxu0 0.0
      %1627 = vmatprep.subr.mxu0 0.0
      %1628 = vmatpush2.msra.mxu0 0.0
      %1629 = vmatprep.subr.mxu0 0.0
      %1630 = vmatpush2.msra.mxu0 0.0
      %1631 = vmatprep.subr.mxu0 0.0
      %1632 = vmatpush2.msra.mxu0 0.0
      %1633 = vmatprep.subr.mxu0 0.0
      %1634 = vmatpush2.msra.mxu0 0.0
      %1635 = vmatprep.subr.mxu0 0.0
      %1636 = vmatpush2.msra.mxu0 0.0
      %1637 = vmatprep.subr.mxu0 0.0
      %1638 = vmatpush2.msra.mxu0 0.0
      %1639 = vmatprep.mubr.f32.mxu0 0.0
      %1640 = vmatmul.mubr.f32.gmra.mxu0 %v1035
      %v1641 = vpop.f32.mrf.mxu0
      %v1642 = vadd.f32 0.0, %v1641
      %v1643 = vpop.f32.mrf.mxu0
      %1644 = vdwg.mxu0
      %v1646 = vsel %vm799, %v1566, 0
      %1648 = vmatprep.subr.mxu0 0.0
      %1649 = vmatpush1.msra.mxu0 0.0
      %1650 = vmatprep.subr.mxu0 0.0
      %1651 = vmatpush1.msra.mxu0 0.0
      %1652 = vmatprep.subr.mxu0 0.0
      %1653 = vmatpush1.msra.mxu0 0.0
      %1654 = vmatprep.subr.mxu0 0.0
      %1655 = vmatpush1.msra.mxu0 0.0
      %1656 = vmatprep.subr.mxu0 0.0
      %1657 = vmatpush1.msra.mxu0 0.0
      %1658 = vmatprep.subr.mxu0 0.0
      %1659 = vmatpush1.msra.mxu0 0.0
      %1660 = vmatprep.subr.mxu0 0.0
      %1661 = vmatpush1.msra.mxu0 0.0
      %1662 = vmatprep.subr.mxu0 0.0
      %1663 = vmatpush1.msra.mxu0 0.0
      %1664 = vmatprep.subr.mxu0 0.0
      %1665 = vmatpush1.msra.mxu0 0.0
      %1666 = vmatprep.subr.mxu0 0.0
      %1667 = vmatpush1.msra.mxu0 0.0
      %1668 = vmatprep.subr.mxu0 0.0
      %1669 = vmatpush1.msra.mxu0 0.0
      %1670 = vmatprep.subr.mxu0 0.0
      %1671 = vmatpush1.msra.mxu0 0.0
      %1672 = vmatprep.subr.mxu0 0.0
      %1673 = vmatpush1.msra.mxu0 %v1570
      %1674 = vmatprep.subr.mxu0 0.0
      %1675 = vmatpush1.msra.mxu0 %v1569
      %1676 = vmatprep.subr.mxu0 0.0
      %1677 = vmatpush1.msra.mxu0 %v1568
      %1678 = vmatprep.subr.mxu0 0.0
      %1679 = vmatpush1.msra.mxu0 %v1567
      %1680 = vmatprep.subr.mxu0 0.0
      %1681 = vmatpush2.msra.mxu0 0.0
      %1682 = vmatprep.subr.mxu0 0.0
      %1683 = vmatpush2.msra.mxu0 0.0
      %1684 = vmatprep.subr.mxu0 0.0
      %1685 = vmatpush2.msra.mxu0 0.0
      %1686 = vmatprep.subr.mxu0 0.0
      %1687 = vmatpush2.msra.mxu0 0.0
      %1688 = vmatprep.subr.mxu0 0.0
      %1689 = vmatpush2.msra.mxu0 0.0
      %1690 = vmatprep.subr.mxu0 0.0
      %1691 = vmatpush2.msra.mxu0 0.0
      %1692 = vmatprep.subr.mxu0 0.0
      %1693 = vmatpush2.msra.mxu0 0.0
      %1694 = vmatprep.subr.mxu0 0.0
      %1695 = vmatpush2.msra.mxu0 0.0
      %1696 = vmatprep.subr.mxu0 0.0
      %1697 = vmatpush2.msra.mxu0 0.0
      %1698 = vmatprep.subr.mxu0 0.0
      %1699 = vmatpush2.msra.mxu0 0.0
      %1700 = vmatprep.subr.mxu0 0.0
      %1701 = vmatpush2.msra.mxu0 0.0
      %1702 = vmatprep.subr.mxu0 0.0
      %1703 = vmatpush2.msra.mxu0 0.0
      %1704 = vmatprep.subr.mxu0 0.0
      %1705 = vmatpush2.msra.mxu0 0.0
      %1706 = vmatprep.subr.mxu0 0.0
      %1707 = vmatpush2.msra.mxu0 0.0
      %1708 = vmatprep.subr.mxu0 0.0
      %1709 = vmatpush2.msra.mxu0 0.0
      %1710 = vmatprep.subr.mxu0 0.0
      %1711 = vmatpush2.msra.mxu0 0.0
      %1712 = vmatprep.mubr.f32.mxu0 0.0
      %1713 = vmatmul.mubr.f32.gmra.mxu0 %v1646
      %v1714 = vpop.f32.mrf.mxu0
      %v1715 = vadd.f32 %v1642, %v1714
      %v1716 = vpop.f32.mrf.mxu0
      %1717 = vdwg.mxu0
      %v1718 = vld [vmem:[%s13] sm:$0x1]
      %v1719 = vadd.f32 %v1715, %v1718
      %v1720 = vxor.u32 %v1719, 2147483648
      %v1721 = vmul.f32 %v1720, 1.442695
      %v1722 = vpow.pop %v1721
      %v1723 = vadd.f32 %v1722, 1.0
      %v1724 = vrcp.pop %v1723
      %v1725 = vmul.f32 1.0, %v1724
      %v1726 = vtanh.pop %v1719
      %v1728 = vlaneseq
      %v1729 = vshrl.u32 %v1728, 7
      %v1730 = vsub.s32 0, %v1729
      %v1731 = vrot.slane %v542, %v1730
      %1732 = vrot.lane.b32.xlu0 %v1731, 32
      %v1733 = vpop.permute.xlu0 %1732
      %v1735 = vmul.f32 %v1725, %v1733
      %1737 = vrot.lane.b32.xlu0 %v1726, 64
      %v1738 = vpop.permute.xlu0 %1737
      %v1740 = vmul.f32 %v1725, %v1738
      %1742 = vrot.lane.b32.xlu0 %v1740, 32
      %v1743 = vpop.permute.xlu0 %1742
      %v1745 = vadd.f32 %v1735, %v1743
      %v1746 = vtanh.pop %v1745
      %1748 = vrot.lane.b32.xlu0 %v1746, 64
      %v1749 = vpop.permute.xlu0 %1748
      %v1751 = vmul.f32 %v1725, %v1749
      %v1752 = vld [vmem:[%s16] sm:$0xff]
      %v1753 = vld [vmem:[%s16 + $0x8] sm:$0xff]
      %v1754 = vld [vmem:[%s16 + $0x10] sm:$0xff]
      %v1755 = vld [vmem:[%s16 + $0x18] sm:$0xff]
      %v1756 = vld [vmem:[%s17] sm:$0x1]
      %1758 = vrot.lane.b32.xlu0 %v1751, 32
      %v1759 = vpop.permute.xlu0 %1758
      %v1760 = vsel %vm799, %v1759, 0
      %1762 = vmatprep.subr.mxu0 0.0
      %1763 = vmatpush1.msra.mxu0 0.0
      %1764 = vmatprep.subr.mxu0 0.0
      %1765 = vmatpush1.msra.mxu0 0.0
      %1766 = vmatprep.subr.mxu0 0.0
      %1767 = vmatpush1.msra.mxu0 0.0
      %1768 = vmatprep.subr.mxu0 0.0
      %1769 = vmatpush1.msra.mxu0 0.0
      %1770 = vmatprep.subr.mxu0 0.0
      %1771 = vmatpush1.msra.mxu0 0.0
      %1772 = vmatprep.subr.mxu0 0.0
      %1773 = vmatpush1.msra.mxu0 0.0
      %1774 = vmatprep.subr.mxu0 0.0
      %1775 = vmatpush1.msra.mxu0 0.0
      %1776 = vmatprep.subr.mxu0 0.0
      %1777 = vmatpush1.msra.mxu0 0.0
      %1778 = vmatprep.subr.mxu0 0.0
      %1779 = vmatpush1.msra.mxu0 0.0
      %1780 = vmatprep.subr.mxu0 0.0
      %1781 = vmatpush1.msra.mxu0 0.0
      %1782 = vmatprep.subr.mxu0 0.0
      %1783 = vmatpush1.msra.mxu0 0.0
      %1784 = vmatprep.subr.mxu0 0.0
      %1785 = vmatpush1.msra.mxu0 0.0
      %1786 = vmatprep.subr.mxu0 0.0
      %1787 = vmatpush1.msra.mxu0 %v1755
      %1788 = vmatprep.subr.mxu0 0.0
      %1789 = vmatpush1.msra.mxu0 %v1754
      %1790 = vmatprep.subr.mxu0 0.0
      %1791 = vmatpush1.msra.mxu0 %v1753
      %1792 = vmatprep.subr.mxu0 0.0
      %1793 = vmatpush1.msra.mxu0 %v1752
      %1794 = vmatprep.subr.mxu0 0.0
      %1795 = vmatpush2.msra.mxu0 0.0
      %1796 = vmatprep.subr.mxu0 0.0
      %1797 = vmatpush2.msra.mxu0 0.0
      %1798 = vmatprep.subr.mxu0 0.0
      %1799 = vmatpush2.msra.mxu0 0.0
      %1800 = vmatprep.subr.mxu0 0.0
      %1801 = vmatpush2.msra.mxu0 0.0
      %1802 = vmatprep.subr.mxu0 0.0
      %1803 = vmatpush2.msra.mxu0 0.0
      %1804 = vmatprep.subr.mxu0 0.0
      %1805 = vmatpush2.msra.mxu0 0.0
      %1806 = vmatprep.subr.mxu0 0.0
      %1807 = vmatpush2.msra.mxu0 0.0
      %1808 = vmatprep.subr.mxu0 0.0
      %1809 = vmatpush2.msra.mxu0 0.0
      %1810 = vmatprep.subr.mxu0 0.0
      %1811 = vmatpush2.msra.mxu0 0.0
      %1812 = vmatprep.subr.mxu0 0.0
      %1813 = vmatpush2.msra.mxu0 0.0
      %1814 = vmatprep.subr.mxu0 0.0
      %1815 = vmatpush2.msra.mxu0 0.0
      %1816 = vmatprep.subr.mxu0 0.0
      %1817 = vmatpush2.msra.mxu0 0.0
      %1818 = vmatprep.subr.mxu0 0.0
      %1819 = vmatpush2.msra.mxu0 0.0
      %1820 = vmatprep.subr.mxu0 0.0
      %1821 = vmatpush2.msra.mxu0 0.0
      %1822 = vmatprep.subr.mxu0 0.0
      %1823 = vmatpush2.msra.mxu0 0.0
      %1824 = vmatprep.subr.mxu0 0.0
      %1825 = vmatpush2.msra.mxu0 0.0
      %1826 = vmatprep.mubr.f32.mxu0 0.0
      %1827 = vmatmul.mubr.f32.gmra.mxu0 %v1760
      %v1828 = vpop.f32.mrf.mxu0
      %v1829 = vadd.f32 %v1756, %v1828
      %v1830 = vpop.f32.mrf.mxu0
      %1831 = vdwg.mxu0
      %vm1832 = vcmask 73728
      %v1833 = vsel %vm1832, %v1829, -inf
      %1834 = vmax.xlane.f32.xlu0 %v1833
      %v1835 = vpop.xlane.xlu0 %1834
      %v1836 = vsub.f32 %v1829, %v1835
      %v1837 = vmul.f32 %v1836, 1.442695
      %v1838 = vpow.pop %v1837
      %v1839 = vsel %vm1832, %v1838, 0.0
      %1840 = vadd.xlane.f32.xlu0 %v1839
      %v1841 = vpop.xlane.xlu0 %1840
      %v1842 = vlog2.pop %v1841
      %v1843 = vmul.f32 %v1842, 0.6931472
      %v1844 = vadd.f32 %v1835, %v1843
      %v1845 = vsub.f32 %v1829, %v1844
      %1848 = vrot.lane.b32.xlu0 %v1845, 64
      %v1849 = vpop.permute.xlu0 %1848
      %v1851 = vsel %vm799, %v1759, %v1745
      %v1852 = vsel %vm1344, %v1851, %v1849
      %vm1853 = vcmask 598016
      %1854 = vst.msk [vmem:[%s531] sm:$0x1] %vm1853, %v1852
      %vm1855 = vcmask 253952
      %1856 = vst.msk [vmem:[#allocation2] sm:$0x1] %vm1855, %v1759
      %1858 = vrot.lane.b32.xlu0 %v1745, 96
      %v1859 = vpop.permute.xlu0 %1858
      %1861 = vst.msk [vmem:[#allocation3] sm:$0x1] %vm1855, %v1859
      %p1862 = scmp.lt.s32.totalorder %s35, 3
      %s1863 = scalar_select %p1862, %s35, 3
      %s1864 = scalar_lea.vmem %s18, %s1863
      // Predicated region
      $region93: #{_fused_decode.1} parent=87 // pred_check
        %p1865 = pneg %p410
      $region94: #{_fused_decode.1} parent=87 // pred_check_branch
        %1867 = sbr.rel (%p1865) target = $region96
      $region95: #{_fused_decode.1} parent=87 // pred_region
        _
      $region96: #{_fused_decode.1} parent=87 // pred_fallthru
        _
    $region88: #{_fused_decode.1} parent=5 // pred_fallthru
      _
    %p1868 = scmp.le.s32.totalorder 2, %s30
    // Predicated region
    $region97: #{_fused_decode.1} parent=5 // pred_check
      %p1869 = pneg %p1868
    $region98: #{_fused_decode.1} parent=5 // pred_check_branch
      %1871 = sbr.rel (%p1869) target = $region100
    $region99: #{_fused_decode.1} parent=5 // pred_region
      %s1872 = ssub.s32 %s30, 2
      // Predicated region
      $region101: #{_fused_decode.1} parent=99 // pred_check
        %p1873 = pneg %p416
      $region102: #{_fused_decode.1} parent=99 // pred_check_branch
        %1875 = sbr.rel (%p1873) target = $region104
      $region103: #{_fused_decode.1} parent=99 // pred_region
        %p1876 = scmp.lt.s32.totalorder %s36, 3
        %s1877 = scalar_select %p1876, %s36, 3
        %s1878 = scalar_lea.vmem %s18, %s1877
      $region104: #{_fused_decode.1} parent=99 // pred_fallthru
        _
    $region100: #{_fused_decode.1} parent=5 // pred_fallthru
      _
  $region6: #{_fused_decode.1} parent=0 // loop_footer
    %s34 = sadd.s32 1, %s30
  $region7: #{_fused_decode.1} parent=0 // loop_footer_branch
    %29 = sbr.rel target = $region3
  $region8: #{_fused_decode.1} parent=0 // loop_exit
    _

</llo_original>
